<compile_context>
chip_gen: v5e
topology: v5e:2x2
jax: 0.10.0
libtpu: 0.0.40
codegen_flags: <defaults>
</compile_context>

<pallas_src>
import numpy as np
import jax
import jax.numpy as jnp
from jax import lax
from jax.experimental import pallas as pl
from jax.experimental.pallas import tpu as pltpu

# ----- "algorithm params" from Features.__init__ (mode='local') --------------
MODE = "local"
STRIDE = (4, 4) if MODE == "local" else (1, 1)
MASK = (17, 17) if MODE == "local" else (220, 155)
N_JOBS = 1                                    # joblib parallelism -> kernel grid
BINS = np.linspace(-2.0, 2.0, 7).astype(np.float32)   # deterministic `bins` param


def _pick_tile(n, max_tile, quantum):
    """Pick (tile, padded_len) for the image axis.

    Preferences: (a) pad at most to the layout quantum (no full-array copy for
    the common case), (b) big tiles to amortize the ~0.35us per-grid-step
    overhead, (c) grid length >= 2 so both v7x TensorCores get work."""
    max_tile = max(max_tile, quantum)
    if n <= quantum:
        return n, n                       # block == full axis, always legal
    n_pad = -(-n // quantum) * quantum    # only the ragged remainder is padded
    cands = [t for t in range(quantum, max_tile + 1, quantum) if n_pad % t == 0]
    pick_any = max(cands)
    two_core = [t for t in cands if n_pad // t >= 2]
    pick_two = max(two_core) if two_core else 0
    pick = pick_two if pick_two * 4 >= pick_any else pick_any
    return pick, n_pad


# ------------------------- statistics kernel ---------------------------------
def _make_stats_kernel(mask, stride, nx, ny):
    mh, mw = int(mask[0]), int(mask[1])
    sh, sw = int(stride[0]), int(stride[1])
    inv_m = 1.0 / float(mh * mw)
    q_blocks = mh // sh                           # whole stride-sized row blocks
    n_blk = nx + q_blocks - 1 if q_blocks > 0 else 0

    def kernel(x_ref, out_ref):
        # x_ref: (H, W, TN) -- images on lanes.  out_ref: (4, nx*ny, TN).
        # Per-image pivot (first pixel): single-pass variance on pivot-shifted
        # data avoids catastrophic cancellation for inputs with large DC offset.
        pivot = x_ref[0].astype(jnp.float32)[0:1, :]           # (1, TN)

        def load_row(r):
            v = x_ref[r].astype(jnp.float32) - pivot           # (W, TN), VPU
            return v, v * v, v, v                              # s, sq, mx, mn

        def acc4(a, b):
            if a is None:
                return b
            return (a[0] + b[0], a[1] + b[1],
                    jnp.maximum(a[2], b[2]), jnp.minimum(a[3], b[3]))

        # Shared per-stride row partials: window i = blocks i..i+q_blocks-1
        # plus (mh % sh) extra single rows -> ~3-4x less row-pass arithmetic.
        parts = []
        for p in range(n_blk):
            acc = None
            for r in range(p * sh, p * sh + sh):
                acc = acc4(acc, load_row(r))
            parts.append(acc)

        means, stds, mxs, mns = [], [], [], []
        for i in range(nx):
            acc = None
            for p in range(i, i + q_blocks):
                acc = acc4(acc, parts[p])
            for r in range(i * sh + q_blocks * sh, i * sh + mh):
                acc = acc4(acc, load_row(r))
            s_i, sq_i, mx_i, mn_i = acc                        # each (W, TN)

            # Column pass: 17-sublane reduce per window, all TN lanes active.
            for j in range(ny):
                c0, c1 = j * sw, j * sw + mw
                cs = jnp.sum(s_i[c0:c1], axis=0, keepdims=True)      # (1, TN)
                csq = jnp.sum(sq_i[c0:c1], axis=0, keepdims=True)
                cmx = jnp.max(mx_i[c0:c1], axis=0, keepdims=True)
                cmn = jnp.min(mn_i[c0:c1], axis=0, keepdims=True)
                m_s = cs * inv_m                                     # shifted mean
                var = jnp.maximum(csq * inv_m - m_s * m_s, 0.0)      # ddof=0
                inv_std = lax.rsqrt(var)                             # EUP slot
                means.append(m_s + pivot)
                stds.append(jnp.sqrt(var))        # 0.0 when var == 0 (like numpy)
                mxs.append((cmx - m_s) * inv_std)
                mns.append((m_s - cmn) * inv_std)

        out_ref[0] = jnp.concatenate(means, axis=0)            # (nx*ny, TN)
        out_ref[1] = jnp.concatenate(stds, axis=0)
        out_ref[2] = jnp.concatenate(mxs, axis=0)
        out_ref[3] = jnp.concatenate(mns, axis=0)

    return kernel


def window_statistics(x, mask=MASK, stride=STRIDE, image_tile=256):
    """all_sliding_windows + statistics.  x: (B, C, H, W) -> (B, 4C, Nx, Ny)."""
    B, C, H, W = x.shape
    mh, mw = mask
    sh, sw = stride
    nx = (H - mh) // sh + 1
    ny = (W - mw) // sw + 1
    N = B * C

    TN, Np = _pick_tile(N, image_tile, quantum=128)
    imgs = jnp.transpose(x.reshape(N, H, W), (1, 2, 0))        # images on lanes
    if Np != N:                                                # ragged remainder only
        imgs = jnp.pad(imgs, ((0, 0), (0, 0), (0, Np - N)))

    out = pl.pallas_call(
        _make_stats_kernel(mask, stride, nx, ny),
        out_shape=jax.ShapeDtypeStruct((4, nx * ny, Np), jnp.float32),
        grid=(Np // TN,),
        in_specs=[pl.BlockSpec((H, W, TN), lambda i: (0, 0, i))],
        out_specs=pl.BlockSpec((4, nx * ny, TN), lambda i: (0, 0, i)),
        compiler_params=pltpu.CompilerParams(
            dimension_semantics=("parallel",)),
    )(imgs)

    out = out[:, :, :N].reshape(4, nx, ny, B, C)
    # concatenate([mean, std, max, min], axis=1) == stats stacked ahead of channels
    out = jnp.transpose(out, (3, 0, 4, 1, 2)).reshape(B, 4 * C, nx, ny)
    return out


# --------------------------- quantize kernel ----------------------------------
def _make_quantize_kernel(bins_const, hw):
    # After z = (img - mean)/std, the second normalization pass is analytic
    # (mean2 = 0.5, std2 = 1/6), so digitize(x, 0.5 + b/6) == #(z >= b).
    # The bins are uniform (linspace), so digitize has a closed form:
    #   q = clip(floor((z - b0) / step) + 1, 0, len(bins))
    # (pixels exactly on a bin edge may round differently at the ulp level).
    bins = np.asarray(bins_const, np.float64)
    b0 = float(bins[0])
    inv_step = float(1.0 / (bins[1] - bins[0]))
    n_bins = int(len(bins))
    inv_n = 1.0 / float(hw)

    def kernel(img_ref, q_ref):
        pivot = img_ref[:, 0:1].astype(jnp.float32)            # per-image pivot
        v = img_ref[...].astype(jnp.float32) - pivot           # (TN, H*W)
        s = jnp.sum(v, axis=-1, keepdims=True)
        sq = jnp.sum(v * v, axis=-1, keepdims=True)
        m_s = s * inv_n
        var = jnp.maximum(sq * inv_n - m_s * m_s, 0.0)
        z = (v - m_s) * lax.rsqrt(var)                         # EUP rsqrt
        q = jnp.floor((z - b0) * inv_step) + 1.0               # ~5 ops/element
        q = jnp.clip(q, 0.0, float(n_bins))
        q_ref[...] = q.astype(jnp.int32).astype(jnp.int8)      # values 0..7

    return kernel


def quantize(x, bins=BINS, image_tile=256):
    """Per-(b, c) image quantization.  x: (B, C, H, W) -> int8 (B, C, H, W)."""
    B, C, H, W = x.shape
    N = B * C
    HW = H * W
    TN, Np = _pick_tile(N, image_tile, quantum=8)
    imgs = x.reshape(N, HW)
    if Np != N:                                                # ragged remainder only
        imgs = jnp.pad(imgs, ((0, Np - N), (0, 0)))

    q = pl.pallas_call(
        _make_quantize_kernel(bins, HW),
        out_shape=jax.ShapeDtypeStruct((Np, HW), jnp.int8),
        grid=(Np // TN,),
        in_specs=[pl.BlockSpec((TN, HW), lambda i: (i, 0))],
        out_specs=pl.BlockSpec((TN, HW), lambda i: (i, 0)),
        compiler_params=pltpu.CompilerParams(
            dimension_semantics=("parallel",)),
    )(imgs)
    return q[:N].reshape(B, C, H, W)


# --------------------------- numpy references ----------------------------------
def _np_windows(imgs, mask, stride):
    shape = (imgs.shape[:-2]
             + ((imgs.shape[-2] - mask[-2]) // stride[-2] + 1,)
             + ((imgs.shape[-1] - mask[-1]) // stride[-1] + 1,)
             + tuple(mask))
    strides = (imgs.strides[:-2]
               + (imgs.strides[-2] * stride[-2],)
               + (imgs.strides[-1] * stride[-1],)
               + imgs.strides[-2:])
    return np.lib.stride_tricks.as_strided(imgs, shape=shape, strides=strides)


def _np_statistics(imgs, mask, stride):
    win = _np_windows(imgs, mask, stride)
    mean = win.mean(axis=(-2, -1))
    std = win.std(axis=(-2, -1))
    mx = (win.max(axis=(-2, -1)) - mean) / std
    mn = (mean - win.min(axis=(-2, -1))) / std
    return np.concatenate([mean, std, mx, mn], axis=1)


def _np_quantize(img, bins):
    mean = img.mean(); std = img.std()
    img = (img - mean) / std
    img = (img + 3) / 6
    mean = img.mean(); std = img.std()
    bins_ = np.full((len(bins),), mean) + np.asarray(bins) * std
    return np.digitize(img, bins_)


if __name__ == "__main__":
    key = jax.random.PRNGKey(0)
    B, C, H, W = 2, 4, 25, 25            # small, spatial >= mask_size (17, 17)
    x = jax.random.normal(key, (B, C, H, W), dtype=jnp.float32)

    stats = jax.block_until_ready(window_statistics(x))
    q = jax.block_until_ready(quantize(x))

    # --- correctness checks against the numpy algorithm ---
    x_np = np.asarray(x)
    nx = (H - MASK[0]) // STRIDE[0] + 1
    ny = (W - MASK[1]) // STRIDE[1] + 1
    ref_stats = _np_statistics(x_np, MASK, STRIDE)
    assert stats.shape == (B, 4 * C, nx, ny)
    np.testing.assert_allclose(np.asarray(stats), ref_stats, rtol=1e-3, atol=1e-3)

    ref_q = np.stack([_np_quantize(x_np.reshape(-1, H, W)[i], BINS)
                      for i in range(B * C)]).reshape(B, C, H, W)
    agree = np.mean(np.asarray(q) == ref_q)
    assert agree > 0.999, f"quantize agreement too low: {agree}"

    # TODO(synk): hist() needs a data-dependent number of histogram levels and
    # parallel_image_processing uses joblib; neither has a static Pallas form.
    print("KERNEL_OK")
</pallas_src>

<mosaic_0001>
module attributes {stable_mosaic.version = 11 : i64} {
  func.func @kernel(%arg0: i32, %arg1: memref<25x25x8xf32, #tpu.memory_space<vmem>>, %arg2: memref<4x9x8xf32, #tpu.memory_space<vmem>>) attributes {dimension_semantics = [#tpu.dimension_semantics<parallel>], iteration_bounds = array<i64: 1>, scalar_prefetch = 0 : i64, scratch_operands = 0 : i64, tpu.core_type = #tpu.core_type<tc>, window_params = [{transform_indices = @transform_0, window_bounds = array<i64: 25, 25, 8>}, {transform_indices = @transform_1, window_bounds = array<i64: 4, 9, 8>}]} {
    %c0 = arith.constant 0 : index
    %c0_0 = arith.constant 0 : index
    %c0_1 = arith.constant 0 : index
    %0 = vector.load %arg1[%c0, %c0_0, %c0_1] : memref<25x25x8xf32, #tpu.memory_space<vmem>>, vector<1x25x8xf32>
    %1 = vector.shape_cast %0 : vector<1x25x8xf32> to vector<25x8xf32>
    %2 = vector.extract_strided_slice %1 {offsets = [0, 0], sizes = [1, 8], strides = [1, 1]} : vector<25x8xf32> to vector<1x8xf32>
    %c0_2 = arith.constant 0 : index
    %c0_3 = arith.constant 0 : index
    %c0_4 = arith.constant 0 : index
    %3 = vector.load %arg1[%c0_2, %c0_3, %c0_4] : memref<25x25x8xf32, #tpu.memory_space<vmem>>, vector<1x25x8xf32>
    %4 = vector.shape_cast %3 : vector<1x25x8xf32> to vector<25x8xf32>
    %5 = vector.broadcast %2 : vector<1x8xf32> to vector<25x8xf32>
    %6 = arith.subf %4, %5 : vector<25x8xf32>
    %7 = arith.mulf %6, %6 : vector<25x8xf32>
    %c1 = arith.constant 1 : index
    %c0_5 = arith.constant 0 : index
    %c0_6 = arith.constant 0 : index
    %8 = vector.load %arg1[%c1, %c0_5, %c0_6] : memref<25x25x8xf32, #tpu.memory_space<vmem>>, vector<1x25x8xf32>
    %9 = vector.shape_cast %8 : vector<1x25x8xf32> to vector<25x8xf32>
    %10 = vector.broadcast %2 : vector<1x8xf32> to vector<25x8xf32>
    %11 = arith.subf %9, %10 : vector<25x8xf32>
    %12 = arith.mulf %11, %11 : vector<25x8xf32>
    %13 = arith.addf %6, %11 : vector<25x8xf32>
    %14 = arith.addf %7, %12 : vector<25x8xf32>
    %15 = arith.maximumf %6, %11 : vector<25x8xf32>
    %16 = arith.minimumf %6, %11 : vector<25x8xf32>
    %c2 = arith.constant 2 : index
    %c0_7 = arith.constant 0 : index
    %c0_8 = arith.constant 0 : index
    %17 = vector.load %arg1[%c2, %c0_7, %c0_8] : memref<25x25x8xf32, #tpu.memory_space<vmem>>, vector<1x25x8xf32>
    %18 = vector.shape_cast %17 : vector<1x25x8xf32> to vector<25x8xf32>
    %19 = vector.broadcast %2 : vector<1x8xf32> to vector<25x8xf32>
    %20 = arith.subf %18, %19 : vector<25x8xf32>
    %21 = arith.mulf %20, %20 : vector<25x8xf32>
    %22 = arith.addf %13, %20 : vector<25x8xf32>
    %23 = arith.addf %14, %21 : vector<25x8xf32>
    %24 = arith.maximumf %15, %20 : vector<25x8xf32>
    %25 = arith.minimumf %16, %20 : vector<25x8xf32>
    %c3 = arith.constant 3 : index
    %c0_9 = arith.constant 0 : index
    %c0_10 = arith.constant 0 : index
    %26 = vector.load %arg1[%c3, %c0_9, %c0_10] : memref<25x25x8xf32, #tpu.memory_space<vmem>>, vector<1x25x8xf32>
    %27 = vector.shape_cast %26 : vector<1x25x8xf32> to vector<25x8xf32>
    %28 = vector.broadcast %2 : vector<1x8xf32> to vector<25x8xf32>
    %29 = arith.subf %27, %28 : vector<25x8xf32>
    %30 = arith.mulf %29, %29 : vector<25x8xf32>
    %31 = arith.addf %22, %29 : vector<25x8xf32>
    %32 = arith.addf %23, %30 : vector<25x8xf32>
    %33 = arith.maximumf %24, %29 : vector<25x8xf32>
    %34 = arith.minimumf %25, %29 : vector<25x8xf32>
    %c4 = arith.constant 4 : index
    %c0_11 = arith.constant 0 : index
    %c0_12 = arith.constant 0 : index
    %35 = vector.load %arg1[%c4, %c0_11, %c0_12] : memref<25x25x8xf32, #tpu.memory_space<vmem>>, vector<1x25x8xf32>
    %36 = vector.shape_cast %35 : vector<1x25x8xf32> to vector<25x8xf32>
    %37 = vector.broadcast %2 : vector<1x8xf32> to vector<25x8xf32>
    %38 = arith.subf %36, %37 : vector<25x8xf32>
    %39 = arith.mulf %38, %38 : vector<25x8xf32>
    %c5 = arith.constant 5 : index
    %c0_13 = arith.constant 0 : index
    %c0_14 = arith.constant 0 : index
    %40 = vector.load %arg1[%c5, %c0_13, %c0_14] : memref<25x25x8xf32, #tpu.memory_space<vmem>>, vector<1x25x8xf32>
    %41 = vector.shape_cast %40 : vector<1x25x8xf32> to vector<25x8xf32>
    %42 = vector.broadcast %2 : vector<1x8xf32> to vector<25x8xf32>
    %43 = arith.subf %41, %42 : vector<25x8xf32>
    %44 = arith.mulf %43, %43 : vector<25x8xf32>
    %45 = arith.addf %38, %43 : vector<25x8xf32>
    %46 = arith.addf %39, %44 : vector<25x8xf32>
    %47 = arith.maximumf %38, %43 : vector<25x8xf32>
    %48 = arith.minimumf %38, %43 : vector<25x8xf32>
    %c6 = arith.constant 6 : index
    %c0_15 = arith.constant 0 : index
    %c0_16 = arith.constant 0 : index
    %49 = vector.load %arg1[%c6, %c0_15, %c0_16] : memref<25x25x8xf32, #tpu.memory_space<vmem>>, vector<1x25x8xf32>
    %50 = vector.shape_cast %49 : vector<1x25x8xf32> to vector<25x8xf32>
    %51 = vector.broadcast %2 : vector<1x8xf32> to vector<25x8xf32>
    %52 = arith.subf %50, %51 : vector<25x8xf32>
    %53 = arith.mulf %52, %52 : vector<25x8xf32>
    %54 = arith.addf %45, %52 : vector<25x8xf32>
    %55 = arith.addf %46, %53 : vector<25x8xf32>
    %56 = arith.maximumf %47, %52 : vector<25x8xf32>
    %57 = arith.minimumf %48, %52 : vector<25x8xf32>
    %c7 = arith.constant 7 : index
    %c0_17 = arith.constant 0 : index
    %c0_18 = arith.constant 0 : index
    %58 = vector.load %arg1[%c7, %c0_17, %c0_18] : memref<25x25x8xf32, #tpu.memory_space<vmem>>, vector<1x25x8xf32>
    %59 = vector.shape_cast %58 : vector<1x25x8xf32> to vector<25x8xf32>
    %60 = vector.broadcast %2 : vector<1x8xf32> to vector<25x8xf32>
    %61 = arith.subf %59, %60 : vector<25x8xf32>
    %62 = arith.mulf %61, %61 : vector<25x8xf32>
    %63 = arith.addf %54, %61 : vector<25x8xf32>
    %64 = arith.addf %55, %62 : vector<25x8xf32>
    %65 = arith.maximumf %56, %61 : vector<25x8xf32>
    %66 = arith.minimumf %57, %61 : vector<25x8xf32>
    %c8 = arith.constant 8 : index
    %c0_19 = arith.constant 0 : index
    %c0_20 = arith.constant 0 : index
    %67 = vector.load %arg1[%c8, %c0_19, %c0_20] : memref<25x25x8xf32, #tpu.memory_space<vmem>>, vector<1x25x8xf32>
    %68 = vector.shape_cast %67 : vector<1x25x8xf32> to vector<25x8xf32>
    %69 = vector.broadcast %2 : vector<1x8xf32> to vector<25x8xf32>
    %70 = arith.subf %68, %69 : vector<25x8xf32>
    %71 = arith.mulf %70, %70 : vector<25x8xf32>
    %c9 = arith.constant 9 : index
    %c0_21 = arith.constant 0 : index
    %c0_22 = arith.constant 0 : index
    %72 = vector.load %arg1[%c9, %c0_21, %c0_22] : memref<25x25x8xf32, #tpu.memory_space<vmem>>, vector<1x25x8xf32>
    %73 = vector.shape_cast %72 : vector<1x25x8xf32> to vector<25x8xf32>
    %74 = vector.broadcast %2 : vector<1x8xf32> to vector<25x8xf32>
    %75 = arith.subf %73, %74 : vector<25x8xf32>
    %76 = arith.mulf %75, %75 : vector<25x8xf32>
    %77 = arith.addf %70, %75 : vector<25x8xf32>
    %78 = arith.addf %71, %76 : vector<25x8xf32>
    %79 = arith.maximumf %70, %75 : vector<25x8xf32>
    %80 = arith.minimumf %70, %75 : vector<25x8xf32>
    %c10 = arith.constant 10 : index
    %c0_23 = arith.constant 0 : index
    %c0_24 = arith.constant 0 : index
    %81 = vector.load %arg1[%c10, %c0_23, %c0_24] : memref<25x25x8xf32, #tpu.memory_space<vmem>>, vector<1x25x8xf32>
    %82 = vector.shape_cast %81 : vector<1x25x8xf32> to vector<25x8xf32>
    %83 = vector.broadcast %2 : vector<1x8xf32> to vector<25x8xf32>
    %84 = arith.subf %82, %83 : vector<25x8xf32>
    %85 = arith.mulf %84, %84 : vector<25x8xf32>
    %86 = arith.addf %77, %84 : vector<25x8xf32>
    %87 = arith.addf %78, %85 : vector<25x8xf32>
    %88 = arith.maximumf %79, %84 : vector<25x8xf32>
    %89 = arith.minimumf %80, %84 : vector<25x8xf32>
    %c11 = arith.constant 11 : index
    %c0_25 = arith.constant 0 : index
    %c0_26 = arith.constant 0 : index
    %90 = vector.load %arg1[%c11, %c0_25, %c0_26] : memref<25x25x8xf32, #tpu.memory_space<vmem>>, vector<1x25x8xf32>
    %91 = vector.shape_cast %90 : vector<1x25x8xf32> to vector<25x8xf32>
    %92 = vector.broadcast %2 : vector<1x8xf32> to vector<25x8xf32>
    %93 = arith.subf %91, %92 : vector<25x8xf32>
    %94 = arith.mulf %93, %93 : vector<25x8xf32>
    %95 = arith.addf %86, %93 : vector<25x8xf32>
    %96 = arith.addf %87, %94 : vector<25x8xf32>
    %97 = arith.maximumf %88, %93 : vector<25x8xf32>
    %98 = arith.minimumf %89, %93 : vector<25x8xf32>
    %c12 = arith.constant 12 : index
    %c0_27 = arith.constant 0 : index
    %c0_28 = arith.constant 0 : index
    %99 = vector.load %arg1[%c12, %c0_27, %c0_28] : memref<25x25x8xf32, #tpu.memory_space<vmem>>, vector<1x25x8xf32>
    %100 = vector.shape_cast %99 : vector<1x25x8xf32> to vector<25x8xf32>
    %101 = vector.broadcast %2 : vector<1x8xf32> to vector<25x8xf32>
    %102 = arith.subf %100, %101 : vector<25x8xf32>
    %103 = arith.mulf %102, %102 : vector<25x8xf32>
    %c13 = arith.constant 13 : index
    %c0_29 = arith.constant 0 : index
    %c0_30 = arith.constant 0 : index
    %104 = vector.load %arg1[%c13, %c0_29, %c0_30] : memref<25x25x8xf32, #tpu.memory_space<vmem>>, vector<1x25x8xf32>
    %105 = vector.shape_cast %104 : vector<1x25x8xf32> to vector<25x8xf32>
    %106 = vector.broadcast %2 : vector<1x8xf32> to vector<25x8xf32>
    %107 = arith.subf %105, %106 : vector<25x8xf32>
    %108 = arith.mulf %107, %107 : vector<25x8xf32>
    %109 = arith.addf %102, %107 : vector<25x8xf32>
    %110 = arith.addf %103, %108 : vector<25x8xf32>
    %111 = arith.maximumf %102, %107 : vector<25x8xf32>
    %112 = arith.minimumf %102, %107 : vector<25x8xf32>
    %c14 = arith.constant 14 : index
    %c0_31 = arith.constant 0 : index
    %c0_32 = arith.constant 0 : index
    %113 = vector.load %arg1[%c14, %c0_31, %c0_32] : memref<25x25x8xf32, #tpu.memory_space<vmem>>, vector<1x25x8xf32>
    %114 = vector.shape_cast %113 : vector<1x25x8xf32> to vector<25x8xf32>
    %115 = vector.broadcast %2 : vector<1x8xf32> to vector<25x8xf32>
    %116 = arith.subf %114, %115 : vector<25x8xf32>
    %117 = arith.mulf %116, %116 : vector<25x8xf32>
    %118 = arith.addf %109, %116 : vector<25x8xf32>
    %119 = arith.addf %110, %117 : vector<25x8xf32>
    %120 = arith.maximumf %111, %116 : vector<25x8xf32>
    %121 = arith.minimumf %112, %116 : vector<25x8xf32>
    %c15 = arith.constant 15 : index
    %c0_33 = arith.constant 0 : index
    %c0_34 = arith.constant 0 : index
    %122 = vector.load %arg1[%c15, %c0_33, %c0_34] : memref<25x25x8xf32, #tpu.memory_space<vmem>>, vector<1x25x8xf32>
    %123 = vector.shape_cast %122 : vector<1x25x8xf32> to vector<25x8xf32>
    %124 = vector.broadcast %2 : vector<1x8xf32> to vector<25x8xf32>
    %125 = arith.subf %123, %124 : vector<25x8xf32>
    %126 = arith.mulf %125, %125 : vector<25x8xf32>
    %127 = arith.addf %118, %125 : vector<25x8xf32>
    %128 = arith.addf %119, %126 : vector<25x8xf32>
    %129 = arith.maximumf %120, %125 : vector<25x8xf32>
    %130 = arith.minimumf %121, %125 : vector<25x8xf32>
    %c16 = arith.constant 16 : index
    %c0_35 = arith.constant 0 : index
    %c0_36 = arith.constant 0 : index
    %131 = vector.load %arg1[%c16, %c0_35, %c0_36] : memref<25x25x8xf32, #tpu.memory_space<vmem>>, vector<1x25x8xf32>
    %132 = vector.shape_cast %131 : vector<1x25x8xf32> to vector<25x8xf32>
    %133 = vector.broadcast %2 : vector<1x8xf32> to vector<25x8xf32>
    %134 = arith.subf %132, %133 : vector<25x8xf32>
    %135 = arith.mulf %134, %134 : vector<25x8xf32>
    %c17 = arith.constant 17 : index
    %c0_37 = arith.constant 0 : index
    %c0_38 = arith.constant 0 : index
    %136 = vector.load %arg1[%c17, %c0_37, %c0_38] : memref<25x25x8xf32, #tpu.memory_space<vmem>>, vector<1x25x8xf32>
    %137 = vector.shape_cast %136 : vector<1x25x8xf32> to vector<25x8xf32>
    %138 = vector.broadcast %2 : vector<1x8xf32> to vector<25x8xf32>
    %139 = arith.subf %137, %138 : vector<25x8xf32>
    %140 = arith.mulf %139, %139 : vector<25x8xf32>
    %141 = arith.addf %134, %139 : vector<25x8xf32>
    %142 = arith.addf %135, %140 : vector<25x8xf32>
    %143 = arith.maximumf %134, %139 : vector<25x8xf32>
    %144 = arith.minimumf %134, %139 : vector<25x8xf32>
    %c18 = arith.constant 18 : index
    %c0_39 = arith.constant 0 : index
    %c0_40 = arith.constant 0 : index
    %145 = vector.load %arg1[%c18, %c0_39, %c0_40] : memref<25x25x8xf32, #tpu.memory_space<vmem>>, vector<1x25x8xf32>
    %146 = vector.shape_cast %145 : vector<1x25x8xf32> to vector<25x8xf32>
    %147 = vector.broadcast %2 : vector<1x8xf32> to vector<25x8xf32>
    %148 = arith.subf %146, %147 : vector<25x8xf32>
    %149 = arith.mulf %148, %148 : vector<25x8xf32>
    %150 = arith.addf %141, %148 : vector<25x8xf32>
    %151 = arith.addf %142, %149 : vector<25x8xf32>
    %152 = arith.maximumf %143, %148 : vector<25x8xf32>
    %153 = arith.minimumf %144, %148 : vector<25x8xf32>
    %c19 = arith.constant 19 : index
    %c0_41 = arith.constant 0 : index
    %c0_42 = arith.constant 0 : index
    %154 = vector.load %arg1[%c19, %c0_41, %c0_42] : memref<25x25x8xf32, #tpu.memory_space<vmem>>, vector<1x25x8xf32>
    %155 = vector.shape_cast %154 : vector<1x25x8xf32> to vector<25x8xf32>
    %156 = vector.broadcast %2 : vector<1x8xf32> to vector<25x8xf32>
    %157 = arith.subf %155, %156 : vector<25x8xf32>
    %158 = arith.mulf %157, %157 : vector<25x8xf32>
    %159 = arith.addf %150, %157 : vector<25x8xf32>
    %160 = arith.addf %151, %158 : vector<25x8xf32>
    %161 = arith.maximumf %152, %157 : vector<25x8xf32>
    %162 = arith.minimumf %153, %157 : vector<25x8xf32>
    %c20 = arith.constant 20 : index
    %c0_43 = arith.constant 0 : index
    %c0_44 = arith.constant 0 : index
    %163 = vector.load %arg1[%c20, %c0_43, %c0_44] : memref<25x25x8xf32, #tpu.memory_space<vmem>>, vector<1x25x8xf32>
    %164 = vector.shape_cast %163 : vector<1x25x8xf32> to vector<25x8xf32>
    %165 = vector.broadcast %2 : vector<1x8xf32> to vector<25x8xf32>
    %166 = arith.subf %164, %165 : vector<25x8xf32>
    %167 = arith.mulf %166, %166 : vector<25x8xf32>
    %c21 = arith.constant 21 : index
    %c0_45 = arith.constant 0 : index
    %c0_46 = arith.constant 0 : index
    %168 = vector.load %arg1[%c21, %c0_45, %c0_46] : memref<25x25x8xf32, #tpu.memory_space<vmem>>, vector<1x25x8xf32>
    %169 = vector.shape_cast %168 : vector<1x25x8xf32> to vector<25x8xf32>
    %170 = vector.broadcast %2 : vector<1x8xf32> to vector<25x8xf32>
    %171 = arith.subf %169, %170 : vector<25x8xf32>
    %172 = arith.mulf %171, %171 : vector<25x8xf32>
    %173 = arith.addf %166, %171 : vector<25x8xf32>
    %174 = arith.addf %167, %172 : vector<25x8xf32>
    %175 = arith.maximumf %166, %171 : vector<25x8xf32>
    %176 = arith.minimumf %166, %171 : vector<25x8xf32>
    %c22 = arith.constant 22 : index
    %c0_47 = arith.constant 0 : index
    %c0_48 = arith.constant 0 : index
    %177 = vector.load %arg1[%c22, %c0_47, %c0_48] : memref<25x25x8xf32, #tpu.memory_space<vmem>>, vector<1x25x8xf32>
    %178 = vector.shape_cast %177 : vector<1x25x8xf32> to vector<25x8xf32>
    %179 = vector.broadcast %2 : vector<1x8xf32> to vector<25x8xf32>
    %180 = arith.subf %178, %179 : vector<25x8xf32>
    %181 = arith.mulf %180, %180 : vector<25x8xf32>
    %182 = arith.addf %173, %180 : vector<25x8xf32>
    %183 = arith.addf %174, %181 : vector<25x8xf32>
    %184 = arith.maximumf %175, %180 : vector<25x8xf32>
    %185 = arith.minimumf %176, %180 : vector<25x8xf32>
    %c23 = arith.constant 23 : index
    %c0_49 = arith.constant 0 : index
    %c0_50 = arith.constant 0 : index
    %186 = vector.load %arg1[%c23, %c0_49, %c0_50] : memref<25x25x8xf32, #tpu.memory_space<vmem>>, vector<1x25x8xf32>
    %187 = vector.shape_cast %186 : vector<1x25x8xf32> to vector<25x8xf32>
    %188 = vector.broadcast %2 : vector<1x8xf32> to vector<25x8xf32>
    %189 = arith.subf %187, %188 : vector<25x8xf32>
    %190 = arith.mulf %189, %189 : vector<25x8xf32>
    %191 = arith.addf %182, %189 : vector<25x8xf32>
    %192 = arith.addf %183, %190 : vector<25x8xf32>
    %193 = arith.maximumf %184, %189 : vector<25x8xf32>
    %194 = arith.minimumf %185, %189 : vector<25x8xf32>
    %195 = arith.addf %31, %63 : vector<25x8xf32>
    %196 = arith.addf %32, %64 : vector<25x8xf32>
    %197 = arith.maximumf %33, %65 : vector<25x8xf32>
    %198 = arith.minimumf %34, %66 : vector<25x8xf32>
    %199 = arith.addf %195, %95 : vector<25x8xf32>
    %200 = arith.addf %196, %96 : vector<25x8xf32>
    %201 = arith.maximumf %197, %97 : vector<25x8xf32>
    %202 = arith.minimumf %198, %98 : vector<25x8xf32>
    %203 = arith.addf %199, %127 : vector<25x8xf32>
    %204 = arith.addf %200, %128 : vector<25x8xf32>
    %205 = arith.maximumf %201, %129 : vector<25x8xf32>
    %206 = arith.minimumf %202, %130 : vector<25x8xf32>
    %c16_51 = arith.constant 16 : index
    %c0_52 = arith.constant 0 : index
    %c0_53 = arith.constant 0 : index
    %207 = vector.load %arg1[%c16_51, %c0_52, %c0_53] : memref<25x25x8xf32, #tpu.memory_space<vmem>>, vector<1x25x8xf32>
    %208 = vector.shape_cast %207 : vector<1x25x8xf32> to vector<25x8xf32>
    %209 = vector.broadcast %2 : vector<1x8xf32> to vector<25x8xf32>
    %210 = arith.subf %208, %209 : vector<25x8xf32>
    %211 = arith.mulf %210, %210 : vector<25x8xf32>
    %212 = arith.addf %203, %210 : vector<25x8xf32>
    %213 = arith.addf %204, %211 : vector<25x8xf32>
    %214 = arith.maximumf %205, %210 : vector<25x8xf32>
    %215 = arith.minimumf %206, %210 : vector<25x8xf32>
    %216 = vector.extract_strided_slice %212 {offsets = [0, 0], sizes = [17, 8], strides = [1, 1]} : vector<25x8xf32> to vector<17x8xf32>
    %cst = arith.constant dense<0.000000e+00> : vector<8xf32>
    %217 = vector.multi_reduction <add>, %216, %cst [0] : vector<17x8xf32> to vector<8xf32>
    %218 = vector.shape_cast %217 : vector<8xf32> to vector<1x8xf32>
    %219 = vector.extract_strided_slice %213 {offsets = [0, 0], sizes = [17, 8], strides = [1, 1]} : vector<25x8xf32> to vector<17x8xf32>
    %cst_54 = arith.constant dense<0.000000e+00> : vector<8xf32>
    %220 = vector.multi_reduction <add>, %219, %cst_54 [0] : vector<17x8xf32> to vector<8xf32>
    %221 = vector.shape_cast %220 : vector<8xf32> to vector<1x8xf32>
    %222 = vector.extract_strided_slice %214 {offsets = [0, 0], sizes = [17, 8], strides = [1, 1]} : vector<25x8xf32> to vector<17x8xf32>
    %cst_55 = arith.constant dense<0xFF800000> : vector<8xf32>
    %223 = vector.multi_reduction <maximumf>, %222, %cst_55 [0] : vector<17x8xf32> to vector<8xf32>
    %224 = vector.shape_cast %223 : vector<8xf32> to vector<1x8xf32>
    %225 = vector.extract_strided_slice %215 {offsets = [0, 0], sizes = [17, 8], strides = [1, 1]} : vector<25x8xf32> to vector<17x8xf32>
    %cst_56 = arith.constant dense<0x7F800000> : vector<8xf32>
    %226 = vector.multi_reduction <minimumf>, %225, %cst_56 [0] : vector<17x8xf32> to vector<8xf32>
    %227 = vector.shape_cast %226 : vector<8xf32> to vector<1x8xf32>
    %cst_57 = arith.constant 0.00346020772 : f32
    %228 = vector.broadcast %cst_57 : f32 to vector<1x8xf32>
    %229 = arith.mulf %218, %228 : vector<1x8xf32>
    %cst_58 = arith.constant 0.00346020772 : f32
    %230 = vector.broadcast %cst_58 : f32 to vector<1x8xf32>
    %231 = arith.mulf %221, %230 : vector<1x8xf32>
    %232 = arith.mulf %229, %229 : vector<1x8xf32>
    %233 = arith.subf %231, %232 : vector<1x8xf32>
    %cst_59 = arith.constant 0.000000e+00 : f32
    %234 = vector.broadcast %cst_59 : f32 to vector<1x8xf32>
    %235 = arith.maximumf %233, %234 : vector<1x8xf32>
    %236 = math.rsqrt %235 : vector<1x8xf32>
    %237 = arith.addf %229, %2 : vector<1x8xf32>
    %238 = math.sqrt %235 : vector<1x8xf32>
    %239 = arith.subf %224, %229 : vector<1x8xf32>
    %240 = arith.mulf %239, %236 : vector<1x8xf32>
    %241 = arith.subf %229, %227 : vector<1x8xf32>
    %242 = arith.mulf %241, %236 : vector<1x8xf32>
    %243 = vector.extract_strided_slice %212 {offsets = [4, 0], sizes = [17, 8], strides = [1, 1]} : vector<25x8xf32> to vector<17x8xf32>
    %cst_60 = arith.constant dense<0.000000e+00> : vector<8xf32>
    %244 = vector.multi_reduction <add>, %243, %cst_60 [0] : vector<17x8xf32> to vector<8xf32>
    %245 = vector.shape_cast %244 : vector<8xf32> to vector<1x8xf32>
    %246 = vector.extract_strided_slice %213 {offsets = [4, 0], sizes = [17, 8], strides = [1, 1]} : vector<25x8xf32> to vector<17x8xf32>
    %cst_61 = arith.constant dense<0.000000e+00> : vector<8xf32>
    %247 = vector.multi_reduction <add>, %246, %cst_61 [0] : vector<17x8xf32> to vector<8xf32>
    %248 = vector.shape_cast %247 : vector<8xf32> to vector<1x8xf32>
    %249 = vector.extract_strided_slice %214 {offsets = [4, 0], sizes = [17, 8], strides = [1, 1]} : vector<25x8xf32> to vector<17x8xf32>
    %cst_62 = arith.constant dense<0xFF800000> : vector<8xf32>
    %250 = vector.multi_reduction <maximumf>, %249, %cst_62 [0] : vector<17x8xf32> to vector<8xf32>
    %251 = vector.shape_cast %250 : vector<8xf32> to vector<1x8xf32>
    %252 = vector.extract_strided_slice %215 {offsets = [4, 0], sizes = [17, 8], strides = [1, 1]} : vector<25x8xf32> to vector<17x8xf32>
    %cst_63 = arith.constant dense<0x7F800000> : vector<8xf32>
    %253 = vector.multi_reduction <minimumf>, %252, %cst_63 [0] : vector<17x8xf32> to vector<8xf32>
    %254 = vector.shape_cast %253 : vector<8xf32> to vector<1x8xf32>
    %cst_64 = arith.constant 0.00346020772 : f32
    %255 = vector.broadcast %cst_64 : f32 to vector<1x8xf32>
    %256 = arith.mulf %245, %255 : vector<1x8xf32>
    %cst_65 = arith.constant 0.00346020772 : f32
    %257 = vector.broadcast %cst_65 : f32 to vector<1x8xf32>
    %258 = arith.mulf %248, %257 : vector<1x8xf32>
    %259 = arith.mulf %256, %256 : vector<1x8xf32>
    %260 = arith.subf %258, %259 : vector<1x8xf32>
    %cst_66 = arith.constant 0.000000e+00 : f32
    %261 = vector.broadcast %cst_66 : f32 to vector<1x8xf32>
    %262 = arith.maximumf %260, %261 : vector<1x8xf32>
    %263 = math.rsqrt %262 : vector<1x8xf32>
    %264 = arith.addf %256, %2 : vector<1x8xf32>
    %265 = math.sqrt %262 : vector<1x8xf32>
    %266 = arith.subf %251, %256 : vector<1x8xf32>
    %267 = arith.mulf %266, %263 : vector<1x8xf32>
    %268 = arith.subf %256, %254 : vector<1x8xf32>
    %269 = arith.mulf %268, %263 : vector<1x8xf32>
    %270 = vector.extract_strided_slice %212 {offsets = [8, 0], sizes = [17, 8], strides = [1, 1]} : vector<25x8xf32> to vector<17x8xf32>
    %cst_67 = arith.constant dense<0.000000e+00> : vector<8xf32>
    %271 = vector.multi_reduction <add>, %270, %cst_67 [0] : vector<17x8xf32> to vector<8xf32>
    %272 = vector.shape_cast %271 : vector<8xf32> to vector<1x8xf32>
    %273 = vector.extract_strided_slice %213 {offsets = [8, 0], sizes = [17, 8], strides = [1, 1]} : vector<25x8xf32> to vector<17x8xf32>
    %cst_68 = arith.constant dense<0.000000e+00> : vector<8xf32>
    %274 = vector.multi_reduction <add>, %273, %cst_68 [0] : vector<17x8xf32> to vector<8xf32>
    %275 = vector.shape_cast %274 : vector<8xf32> to vector<1x8xf32>
    %276 = vector.extract_strided_slice %214 {offsets = [8, 0], sizes = [17, 8], strides = [1, 1]} : vector<25x8xf32> to vector<17x8xf32>
    %cst_69 = arith.constant dense<0xFF800000> : vector<8xf32>
    %277 = vector.multi_reduction <maximumf>, %276, %cst_69 [0] : vector<17x8xf32> to vector<8xf32>
    %278 = vector.shape_cast %277 : vector<8xf32> to vector<1x8xf32>
    %279 = vector.extract_strided_slice %215 {offsets = [8, 0], sizes = [17, 8], strides = [1, 1]} : vector<25x8xf32> to vector<17x8xf32>
    %cst_70 = arith.constant dense<0x7F800000> : vector<8xf32>
    %280 = vector.multi_reduction <minimumf>, %279, %cst_70 [0] : vector<17x8xf32> to vector<8xf32>
    %281 = vector.shape_cast %280 : vector<8xf32> to vector<1x8xf32>
    %cst_71 = arith.constant 0.00346020772 : f32
    %282 = vector.broadcast %cst_71 : f32 to vector<1x8xf32>
    %283 = arith.mulf %272, %282 : vector<1x8xf32>
    %cst_72 = arith.constant 0.00346020772 : f32
    %284 = vector.broadcast %cst_72 : f32 to vector<1x8xf32>
    %285 = arith.mulf %275, %284 : vector<1x8xf32>
    %286 = arith.mulf %283, %283 : vector<1x8xf32>
    %287 = arith.subf %285, %286 : vector<1x8xf32>
    %cst_73 = arith.constant 0.000000e+00 : f32
    %288 = vector.broadcast %cst_73 : f32 to vector<1x8xf32>
    %289 = arith.maximumf %287, %288 : vector<1x8xf32>
    %290 = math.rsqrt %289 : vector<1x8xf32>
    %291 = arith.addf %283, %2 : vector<1x8xf32>
    %292 = math.sqrt %289 : vector<1x8xf32>
    %293 = arith.subf %278, %283 : vector<1x8xf32>
    %294 = arith.mulf %293, %290 : vector<1x8xf32>
    %295 = arith.subf %283, %281 : vector<1x8xf32>
    %296 = arith.mulf %295, %290 : vector<1x8xf32>
    %297 = arith.addf %63, %95 : vector<25x8xf32>
    %298 = arith.addf %64, %96 : vector<25x8xf32>
    %299 = arith.maximumf %65, %97 : vector<25x8xf32>
    %300 = arith.minimumf %66, %98 : vector<25x8xf32>
    %301 = arith.addf %297, %127 : vector<25x8xf32>
    %302 = arith.addf %298, %128 : vector<25x8xf32>
    %303 = arith.maximumf %299, %129 : vector<25x8xf32>
    %304 = arith.minimumf %300, %130 : vector<25x8xf32>
    %305 = arith.addf %301, %159 : vector<25x8xf32>
    %306 = arith.addf %302, %160 : vector<25x8xf32>
    %307 = arith.maximumf %303, %161 : vector<25x8xf32>
    %308 = arith.minimumf %304, %162 : vector<25x8xf32>
    %c20_74 = arith.constant 20 : index
    %c0_75 = arith.constant 0 : index
    %c0_76 = arith.constant 0 : index
    %309 = vector.load %arg1[%c20_74, %c0_75, %c0_76] : memref<25x25x8xf32, #tpu.memory_space<vmem>>, vector<1x25x8xf32>
    %310 = vector.shape_cast %309 : vector<1x25x8xf32> to vector<25x8xf32>
    %311 = vector.broadcast %2 : vector<1x8xf32> to vector<25x8xf32>
    %312 = arith.subf %310, %311 : vector<25x8xf32>
    %313 = arith.mulf %312, %312 : vector<25x8xf32>
    %314 = arith.addf %305, %312 : vector<25x8xf32>
    %315 = arith.addf %306, %313 : vector<25x8xf32>
    %316 = arith.maximumf %307, %312 : vector<25x8xf32>
    %317 = arith.minimumf %308, %312 : vector<25x8xf32>
    %318 = vector.extract_strided_slice %314 {offsets = [0, 0], sizes = [17, 8], strides = [1, 1]} : vector<25x8xf32> to vector<17x8xf32>
    %cst_77 = arith.constant dense<0.000000e+00> : vector<8xf32>
    %319 = vector.multi_reduction <add>, %318, %cst_77 [0] : vector<17x8xf32> to vector<8xf32>
    %320 = vector.shape_cast %319 : vector<8xf32> to vector<1x8xf32>
    %321 = vector.extract_strided_slice %315 {offsets = [0, 0], sizes = [17, 8], strides = [1, 1]} : vector<25x8xf32> to vector<17x8xf32>
    %cst_78 = arith.constant dense<0.000000e+00> : vector<8xf32>
    %322 = vector.multi_reduction <add>, %321, %cst_78 [0] : vector<17x8xf32> to vector<8xf32>
    %323 = vector.shape_cast %322 : vector<8xf32> to vector<1x8xf32>
    %324 = vector.extract_strided_slice %316 {offsets = [0, 0], sizes = [17, 8], strides = [1, 1]} : vector<25x8xf32> to vector<17x8xf32>
    %cst_79 = arith.constant dense<0xFF800000> : vector<8xf32>
    %325 = vector.multi_reduction <maximumf>, %324, %cst_79 [0] : vector<17x8xf32> to vector<8xf32>
    %326 = vector.shape_cast %325 : vector<8xf32> to vector<1x8xf32>
    %327 = vector.extract_strided_slice %317 {offsets = [0, 0], sizes = [17, 8], strides = [1, 1]} : vector<25x8xf32> to vector<17x8xf32>
    %cst_80 = arith.constant dense<0x7F800000> : vector<8xf32>
    %328 = vector.multi_reduction <minimumf>, %327, %cst_80 [0] : vector<17x8xf32> to vector<8xf32>
    %329 = vector.shape_cast %328 : vector<8xf32> to vector<1x8xf32>
    %cst_81 = arith.constant 0.00346020772 : f32
    %330 = vector.broadcast %cst_81 : f32 to vector<1x8xf32>
    %331 = arith.mulf %320, %330 : vector<1x8xf32>
    %cst_82 = arith.constant 0.00346020772 : f32
    %332 = vector.broadcast %cst_82 : f32 to vector<1x8xf32>
    %333 = arith.mulf %323, %332 : vector<1x8xf32>
    %334 = arith.mulf %331, %331 : vector<1x8xf32>
    %335 = arith.subf %333, %334 : vector<1x8xf32>
    %cst_83 = arith.constant 0.000000e+00 : f32
    %336 = vector.broadcast %cst_83 : f32 to vector<1x8xf32>
    %337 = arith.maximumf %335, %336 : vector<1x8xf32>
    %338 = math.rsqrt %337 : vector<1x8xf32>
    %339 = arith.addf %331, %2 : vector<1x8xf32>
    %340 = math.sqrt %337 : vector<1x8xf32>
    %341 = arith.subf %326, %331 : vector<1x8xf32>
    %342 = arith.mulf %341, %338 : vector<1x8xf32>
    %343 = arith.subf %331, %329 : vector<1x8xf32>
    %344 = arith.mulf %343, %338 : vector<1x8xf32>
    %345 = vector.extract_strided_slice %314 {offsets = [4, 0], sizes = [17, 8], strides = [1, 1]} : vector<25x8xf32> to vector<17x8xf32>
    %cst_84 = arith.constant dense<0.000000e+00> : vector<8xf32>
    %346 = vector.multi_reduction <add>, %345, %cst_84 [0] : vector<17x8xf32> to vector<8xf32>
    %347 = vector.shape_cast %346 : vector<8xf32> to vector<1x8xf32>
    %348 = vector.extract_strided_slice %315 {offsets = [4, 0], sizes = [17, 8], strides = [1, 1]} : vector<25x8xf32> to vector<17x8xf32>
    %cst_85 = arith.constant dense<0.000000e+00> : vector<8xf32>
    %349 = vector.multi_reduction <add>, %348, %cst_85 [0] : vector<17x8xf32> to vector<8xf32>
    %350 = vector.shape_cast %349 : vector<8xf32> to vector<1x8xf32>
    %351 = vector.extract_strided_slice %316 {offsets = [4, 0], sizes = [17, 8], strides = [1, 1]} : vector<25x8xf32> to vector<17x8xf32>
    %cst_86 = arith.constant dense<0xFF800000> : vector<8xf32>
    %352 = vector.multi_reduction <maximumf>, %351, %cst_86 [0] : vector<17x8xf32> to vector<8xf32>
    %353 = vector.shape_cast %352 : vector<8xf32> to vector<1x8xf32>
    %354 = vector.extract_strided_slice %317 {offsets = [4, 0], sizes = [17, 8], strides = [1, 1]} : vector<25x8xf32> to vector<17x8xf32>
    %cst_87 = arith.constant dense<0x7F800000> : vector<8xf32>
    %355 = vector.multi_reduction <minimumf>, %354, %cst_87 [0] : vector<17x8xf32> to vector<8xf32>
    %356 = vector.shape_cast %355 : vector<8xf32> to vector<1x8xf32>
    %cst_88 = arith.constant 0.00346020772 : f32
    %357 = vector.broadcast %cst_88 : f32 to vector<1x8xf32>
    %358 = arith.mulf %347, %357 : vector<1x8xf32>
    %cst_89 = arith.constant 0.00346020772 : f32
    %359 = vector.broadcast %cst_89 : f32 to vector<1x8xf32>
    %360 = arith.mulf %350, %359 : vector<1x8xf32>
    %361 = arith.mulf %358, %358 : vector<1x8xf32>
    %362 = arith.subf %360, %361 : vector<1x8xf32>
    %cst_90 = arith.constant 0.000000e+00 : f32
    %363 = vector.broadcast %cst_90 : f32 to vector<1x8xf32>
    %364 = arith.maximumf %362, %363 : vector<1x8xf32>
    %365 = math.rsqrt %364 : vector<1x8xf32>
    %366 = arith.addf %358, %2 : vector<1x8xf32>
    %367 = math.sqrt %364 : vector<1x8xf32>
    %368 = arith.subf %353, %358 : vector<1x8xf32>
    %369 = arith.mulf %368, %365 : vector<1x8xf32>
    %370 = arith.subf %358, %356 : vector<1x8xf32>
    %371 = arith.mulf %370, %365 : vector<1x8xf32>
    %372 = vector.extract_strided_slice %314 {offsets = [8, 0], sizes = [17, 8], strides = [1, 1]} : vector<25x8xf32> to vector<17x8xf32>
    %cst_91 = arith.constant dense<0.000000e+00> : vector<8xf32>
    %373 = vector.multi_reduction <add>, %372, %cst_91 [0] : vector<17x8xf32> to vector<8xf32>
    %374 = vector.shape_cast %373 : vector<8xf32> to vector<1x8xf32>
    %375 = vector.extract_strided_slice %315 {offsets = [8, 0], sizes = [17, 8], strides = [1, 1]} : vector<25x8xf32> to vector<17x8xf32>
    %cst_92 = arith.constant dense<0.000000e+00> : vector<8xf32>
    %376 = vector.multi_reduction <add>, %375, %cst_92 [0] : vector<17x8xf32> to vector<8xf32>
    %377 = vector.shape_cast %376 : vector<8xf32> to vector<1x8xf32>
    %378 = vector.extract_strided_slice %316 {offsets = [8, 0], sizes = [17, 8], strides = [1, 1]} : vector<25x8xf32> to vector<17x8xf32>
    %cst_93 = arith.constant dense<0xFF800000> : vector<8xf32>
    %379 = vector.multi_reduction <maximumf>, %378, %cst_93 [0] : vector<17x8xf32> to vector<8xf32>
    %380 = vector.shape_cast %379 : vector<8xf32> to vector<1x8xf32>
    %381 = vector.extract_strided_slice %317 {offsets = [8, 0], sizes = [17, 8], strides = [1, 1]} : vector<25x8xf32> to vector<17x8xf32>
    %cst_94 = arith.constant dense<0x7F800000> : vector<8xf32>
    %382 = vector.multi_reduction <minimumf>, %381, %cst_94 [0] : vector<17x8xf32> to vector<8xf32>
    %383 = vector.shape_cast %382 : vector<8xf32> to vector<1x8xf32>
    %cst_95 = arith.constant 0.00346020772 : f32
    %384 = vector.broadcast %cst_95 : f32 to vector<1x8xf32>
    %385 = arith.mulf %374, %384 : vector<1x8xf32>
    %cst_96 = arith.constant 0.00346020772 : f32
    %386 = vector.broadcast %cst_96 : f32 to vector<1x8xf32>
    %387 = arith.mulf %377, %386 : vector<1x8xf32>
    %388 = arith.mulf %385, %385 : vector<1x8xf32>
    %389 = arith.subf %387, %388 : vector<1x8xf32>
    %cst_97 = arith.constant 0.000000e+00 : f32
    %390 = vector.broadcast %cst_97 : f32 to vector<1x8xf32>
    %391 = arith.maximumf %389, %390 : vector<1x8xf32>
    %392 = math.rsqrt %391 : vector<1x8xf32>
    %393 = arith.addf %385, %2 : vector<1x8xf32>
    %394 = math.sqrt %391 : vector<1x8xf32>
    %395 = arith.subf %380, %385 : vector<1x8xf32>
    %396 = arith.mulf %395, %392 : vector<1x8xf32>
    %397 = arith.subf %385, %383 : vector<1x8xf32>
    %398 = arith.mulf %397, %392 : vector<1x8xf32>
    %399 = arith.addf %95, %127 : vector<25x8xf32>
    %400 = arith.addf %96, %128 : vector<25x8xf32>
    %401 = arith.maximumf %97, %129 : vector<25x8xf32>
    %402 = arith.minimumf %98, %130 : vector<25x8xf32>
    %403 = arith.addf %399, %159 : vector<25x8xf32>
    %404 = arith.addf %400, %160 : vector<25x8xf32>
    %405 = arith.maximumf %401, %161 : vector<25x8xf32>
    %406 = arith.minimumf %402, %162 : vector<25x8xf32>
    %407 = arith.addf %403, %191 : vector<25x8xf32>
    %408 = arith.addf %404, %192 : vector<25x8xf32>
    %409 = arith.maximumf %405, %193 : vector<25x8xf32>
    %410 = arith.minimumf %406, %194 : vector<25x8xf32>
    %c24 = arith.constant 24 : index
    %c0_98 = arith.constant 0 : index
    %c0_99 = arith.constant 0 : index
    %411 = vector.load %arg1[%c24, %c0_98, %c0_99] : memref<25x25x8xf32, #tpu.memory_space<vmem>>, vector<1x25x8xf32>
    %412 = vector.shape_cast %411 : vector<1x25x8xf32> to vector<25x8xf32>
    %413 = vector.broadcast %2 : vector<1x8xf32> to vector<25x8xf32>
    %414 = arith.subf %412, %413 : vector<25x8xf32>
    %415 = arith.mulf %414, %414 : vector<25x8xf32>
    %416 = arith.addf %407, %414 : vector<25x8xf32>
    %417 = arith.addf %408, %415 : vector<25x8xf32>
    %418 = arith.maximumf %409, %414 : vector<25x8xf32>
    %419 = arith.minimumf %410, %414 : vector<25x8xf32>
    %420 = vector.extract_strided_slice %416 {offsets = [0, 0], sizes = [17, 8], strides = [1, 1]} : vector<25x8xf32> to vector<17x8xf32>
    %cst_100 = arith.constant dense<0.000000e+00> : vector<8xf32>
    %421 = vector.multi_reduction <add>, %420, %cst_100 [0] : vector<17x8xf32> to vector<8xf32>
    %422 = vector.shape_cast %421 : vector<8xf32> to vector<1x8xf32>
    %423 = vector.extract_strided_slice %417 {offsets = [0, 0], sizes = [17, 8], strides = [1, 1]} : vector<25x8xf32> to vector<17x8xf32>
    %cst_101 = arith.constant dense<0.000000e+00> : vector<8xf32>
    %424 = vector.multi_reduction <add>, %423, %cst_101 [0] : vector<17x8xf32> to vector<8xf32>
    %425 = vector.shape_cast %424 : vector<8xf32> to vector<1x8xf32>
    %426 = vector.extract_strided_slice %418 {offsets = [0, 0], sizes = [17, 8], strides = [1, 1]} : vector<25x8xf32> to vector<17x8xf32>
    %cst_102 = arith.constant dense<0xFF800000> : vector<8xf32>
    %427 = vector.multi_reduction <maximumf>, %426, %cst_102 [0] : vector<17x8xf32> to vector<8xf32>
    %428 = vector.shape_cast %427 : vector<8xf32> to vector<1x8xf32>
    %429 = vector.extract_strided_slice %419 {offsets = [0, 0], sizes = [17, 8], strides = [1, 1]} : vector<25x8xf32> to vector<17x8xf32>
    %cst_103 = arith.constant dense<0x7F800000> : vector<8xf32>
    %430 = vector.multi_reduction <minimumf>, %429, %cst_103 [0] : vector<17x8xf32> to vector<8xf32>
    %431 = vector.shape_cast %430 : vector<8xf32> to vector<1x8xf32>
    %cst_104 = arith.constant 0.00346020772 : f32
    %432 = vector.broadcast %cst_104 : f32 to vector<1x8xf32>
    %433 = arith.mulf %422, %432 : vector<1x8xf32>
    %cst_105 = arith.constant 0.00346020772 : f32
    %434 = vector.broadcast %cst_105 : f32 to vector<1x8xf32>
    %435 = arith.mulf %425, %434 : vector<1x8xf32>
    %436 = arith.mulf %433, %433 : vector<1x8xf32>
    %437 = arith.subf %435, %436 : vector<1x8xf32>
    %cst_106 = arith.constant 0.000000e+00 : f32
    %438 = vector.broadcast %cst_106 : f32 to vector<1x8xf32>
    %439 = arith.maximumf %437, %438 : vector<1x8xf32>
    %440 = math.rsqrt %439 : vector<1x8xf32>
    %441 = arith.addf %433, %2 : vector<1x8xf32>
    %442 = math.sqrt %439 : vector<1x8xf32>
    %443 = arith.subf %428, %433 : vector<1x8xf32>
    %444 = arith.mulf %443, %440 : vector<1x8xf32>
    %445 = arith.subf %433, %431 : vector<1x8xf32>
    %446 = arith.mulf %445, %440 : vector<1x8xf32>
    %447 = vector.extract_strided_slice %416 {offsets = [4, 0], sizes = [17, 8], strides = [1, 1]} : vector<25x8xf32> to vector<17x8xf32>
    %cst_107 = arith.constant dense<0.000000e+00> : vector<8xf32>
    %448 = vector.multi_reduction <add>, %447, %cst_107 [0] : vector<17x8xf32> to vector<8xf32>
    %449 = vector.shape_cast %448 : vector<8xf32> to vector<1x8xf32>
    %450 = vector.extract_strided_slice %417 {offsets = [4, 0], sizes = [17, 8], strides = [1, 1]} : vector<25x8xf32> to vector<17x8xf32>
    %cst_108 = arith.constant dense<0.000000e+00> : vector<8xf32>
    %451 = vector.multi_reduction <add>, %450, %cst_108 [0] : vector<17x8xf32> to vector<8xf32>
    %452 = vector.shape_cast %451 : vector<8xf32> to vector<1x8xf32>
    %453 = vector.extract_strided_slice %418 {offsets = [4, 0], sizes = [17, 8], strides = [1, 1]} : vector<25x8xf32> to vector<17x8xf32>
    %cst_109 = arith.constant dense<0xFF800000> : vector<8xf32>
    %454 = vector.multi_reduction <maximumf>, %453, %cst_109 [0] : vector<17x8xf32> to vector<8xf32>
    %455 = vector.shape_cast %454 : vector<8xf32> to vector<1x8xf32>
    %456 = vector.extract_strided_slice %419 {offsets = [4, 0], sizes = [17, 8], strides = [1, 1]} : vector<25x8xf32> to vector<17x8xf32>
    %cst_110 = arith.constant dense<0x7F800000> : vector<8xf32>
    %457 = vector.multi_reduction <minimumf>, %456, %cst_110 [0] : vector<17x8xf32> to vector<8xf32>
    %458 = vector.shape_cast %457 : vector<8xf32> to vector<1x8xf32>
    %cst_111 = arith.constant 0.00346020772 : f32
    %459 = vector.broadcast %cst_111 : f32 to vector<1x8xf32>
    %460 = arith.mulf %449, %459 : vector<1x8xf32>
    %cst_112 = arith.constant 0.00346020772 : f32
    %461 = vector.broadcast %cst_112 : f32 to vector<1x8xf32>
    %462 = arith.mulf %452, %461 : vector<1x8xf32>
    %463 = arith.mulf %460, %460 : vector<1x8xf32>
    %464 = arith.subf %462, %463 : vector<1x8xf32>
    %cst_113 = arith.constant 0.000000e+00 : f32
    %465 = vector.broadcast %cst_113 : f32 to vector<1x8xf32>
    %466 = arith.maximumf %464, %465 : vector<1x8xf32>
    %467 = math.rsqrt %466 : vector<1x8xf32>
    %468 = arith.addf %460, %2 : vector<1x8xf32>
    %469 = math.sqrt %466 : vector<1x8xf32>
    %470 = arith.subf %455, %460 : vector<1x8xf32>
    %471 = arith.mulf %470, %467 : vector<1x8xf32>
    %472 = arith.subf %460, %458 : vector<1x8xf32>
    %473 = arith.mulf %472, %467 : vector<1x8xf32>
    %474 = vector.extract_strided_slice %416 {offsets = [8, 0], sizes = [17, 8], strides = [1, 1]} : vector<25x8xf32> to vector<17x8xf32>
    %cst_114 = arith.constant dense<0.000000e+00> : vector<8xf32>
    %475 = vector.multi_reduction <add>, %474, %cst_114 [0] : vector<17x8xf32> to vector<8xf32>
    %476 = vector.shape_cast %475 : vector<8xf32> to vector<1x8xf32>
    %477 = vector.extract_strided_slice %417 {offsets = [8, 0], sizes = [17, 8], strides = [1, 1]} : vector<25x8xf32> to vector<17x8xf32>
    %cst_115 = arith.constant dense<0.000000e+00> : vector<8xf32>
    %478 = vector.multi_reduction <add>, %477, %cst_115 [0] : vector<17x8xf32> to vector<8xf32>
    %479 = vector.shape_cast %478 : vector<8xf32> to vector<1x8xf32>
    %480 = vector.extract_strided_slice %418 {offsets = [8, 0], sizes = [17, 8], strides = [1, 1]} : vector<25x8xf32> to vector<17x8xf32>
    %cst_116 = arith.constant dense<0xFF800000> : vector<8xf32>
    %481 = vector.multi_reduction <maximumf>, %480, %cst_116 [0] : vector<17x8xf32> to vector<8xf32>
    %482 = vector.shape_cast %481 : vector<8xf32> to vector<1x8xf32>
    %483 = vector.extract_strided_slice %419 {offsets = [8, 0], sizes = [17, 8], strides = [1, 1]} : vector<25x8xf32> to vector<17x8xf32>
    %cst_117 = arith.constant dense<0x7F800000> : vector<8xf32>
    %484 = vector.multi_reduction <minimumf>, %483, %cst_117 [0] : vector<17x8xf32> to vector<8xf32>
    %485 = vector.shape_cast %484 : vector<8xf32> to vector<1x8xf32>
    %cst_118 = arith.constant 0.00346020772 : f32
    %486 = vector.broadcast %cst_118 : f32 to vector<1x8xf32>
    %487 = arith.mulf %476, %486 : vector<1x8xf32>
    %cst_119 = arith.constant 0.00346020772 : f32
    %488 = vector.broadcast %cst_119 : f32 to vector<1x8xf32>
    %489 = arith.mulf %479, %488 : vector<1x8xf32>
    %490 = arith.mulf %487, %487 : vector<1x8xf32>
    %491 = arith.subf %489, %490 : vector<1x8xf32>
    %cst_120 = arith.constant 0.000000e+00 : f32
    %492 = vector.broadcast %cst_120 : f32 to vector<1x8xf32>
    %493 = arith.maximumf %491, %492 : vector<1x8xf32>
    %494 = math.rsqrt %493 : vector<1x8xf32>
    %495 = arith.addf %487, %2 : vector<1x8xf32>
    %496 = math.sqrt %493 : vector<1x8xf32>
    %497 = arith.subf %482, %487 : vector<1x8xf32>
    %498 = arith.mulf %497, %494 : vector<1x8xf32>
    %499 = arith.subf %487, %485 : vector<1x8xf32>
    %500 = arith.mulf %499, %494 : vector<1x8xf32>
    %501 = tpu.concatenate %237, %264, %291, %339, %366, %393, %441, %468, %495 in 0 : vector<1x8xf32>, vector<1x8xf32>, vector<1x8xf32>, vector<1x8xf32>, vector<1x8xf32>, vector<1x8xf32>, vector<1x8xf32>, vector<1x8xf32>, vector<1x8xf32> -> vector<9x8xf32>
    %c0_121 = arith.constant 0 : index
    %c0_122 = arith.constant 0 : index
    %c0_123 = arith.constant 0 : index
    %502 = vector.load %arg2[%c0_121, %c0_122, %c0_123] : memref<4x9x8xf32, #tpu.memory_space<vmem>>, vector<1x9x8xf32>
    %503 = vector.shape_cast %502 : vector<1x9x8xf32> to vector<9x8xf32>
    %504 = vector.shape_cast %501 : vector<9x8xf32> to vector<1x9x8xf32>
    tpu.vector_store %arg2[%c0_121, %c0_122, %c0_123], %504 {strides = array<i32>} : memref<4x9x8xf32, #tpu.memory_space<vmem>>, vector<1x9x8xf32>,
    %505 = tpu.concatenate %238, %265, %292, %340, %367, %394, %442, %469, %496 in 0 : vector<1x8xf32>, vector<1x8xf32>, vector<1x8xf32>, vector<1x8xf32>, vector<1x8xf32>, vector<1x8xf32>, vector<1x8xf32>, vector<1x8xf32>, vector<1x8xf32> -> vector<9x8xf32>
    %c1_124 = arith.constant 1 : index
    %c0_125 = arith.constant 0 : index
    %c0_126 = arith.constant 0 : index
    %506 = vector.load %arg2[%c1_124, %c0_125, %c0_126] : memref<4x9x8xf32, #tpu.memory_space<vmem>>, vector<1x9x8xf32>
    %507 = vector.shape_cast %506 : vector<1x9x8xf32> to vector<9x8xf32>
    %508 = vector.shape_cast %505 : vector<9x8xf32> to vector<1x9x8xf32>
    tpu.vector_store %arg2[%c1_124, %c0_125, %c0_126], %508 {strides = array<i32>} : memref<4x9x8xf32, #tpu.memory_space<vmem>>, vector<1x9x8xf32>,
    %509 = tpu.concatenate %240, %267, %294, %342, %369, %396, %444, %471, %498 in 0 : vector<1x8xf32>, vector<1x8xf32>, vector<1x8xf32>, vector<1x8xf32>, vector<1x8xf32>, vector<1x8xf32>, vector<1x8xf32>, vector<1x8xf32>, vector<1x8xf32> -> vector<9x8xf32>
    %c2_127 = arith.constant 2 : index
    %c0_128 = arith.constant 0 : index
    %c0_129 = arith.constant 0 : index
    %510 = vector.load %arg2[%c2_127, %c0_128, %c0_129] : memref<4x9x8xf32, #tpu.memory_space<vmem>>, vector<1x9x8xf32>
    %511 = vector.shape_cast %510 : vector<1x9x8xf32> to vector<9x8xf32>
    %512 = vector.shape_cast %509 : vector<9x8xf32> to vector<1x9x8xf32>
    tpu.vector_store %arg2[%c2_127, %c0_128, %c0_129], %512 {strides = array<i32>} : memref<4x9x8xf32, #tpu.memory_space<vmem>>, vector<1x9x8xf32>,
    %513 = tpu.concatenate %242, %269, %296, %344, %371, %398, %446, %473, %500 in 0 : vector<1x8xf32>, vector<1x8xf32>, vector<1x8xf32>, vector<1x8xf32>, vector<1x8xf32>, vector<1x8xf32>, vector<1x8xf32>, vector<1x8xf32>, vector<1x8xf32> -> vector<9x8xf32>
    %c3_130 = arith.constant 3 : index
    %c0_131 = arith.constant 0 : index
    %c0_132 = arith.constant 0 : index
    %514 = vector.load %arg2[%c3_130, %c0_131, %c0_132] : memref<4x9x8xf32, #tpu.memory_space<vmem>>, vector<1x9x8xf32>
    %515 = vector.shape_cast %514 : vector<1x9x8xf32> to vector<9x8xf32>
    %516 = vector.shape_cast %513 : vector<9x8xf32> to vector<1x9x8xf32>
    tpu.vector_store %arg2[%c3_130, %c0_131, %c0_132], %516 {strides = array<i32>} : memref<4x9x8xf32, #tpu.memory_space<vmem>>, vector<1x9x8xf32>,
    return
  }
  func.func @transform_0(%arg0: i32) -> (i32, i32, i32) {
    %c0_i32 = arith.constant 0 : i32
    %c0_i32_0 = arith.constant 0 : i32
    %c0_i32_1 = arith.constant 0 : i32
    return %c0_i32, %c0_i32_0, %arg0 : i32, i32, i32
  }
  func.func @transform_1(%arg0: i32) -> (i32, i32, i32) {
    %c0_i32 = arith.constant 0 : i32
    %c0_i32_0 = arith.constant 0 : i32
    %c0_i32_1 = arith.constant 0 : i32
    return %c0_i32, %c0_i32_0, %arg0 : i32, i32, i32
  }
}

</mosaic_0001>

<llo_original>
// kernel: tpu_custom_call.1
$region0: #{tpu_custom_call.1}
  #allocation0 [shape = 'u32[]', space=smem, size = 0x4, offset = 0x4, fixed_abs, tag = 'smem constant byte address 0x4 - core index']
  #allocation1 [shape = 'u32[72,128]{1,0:T(1,128)}', space=vmem, size = 0x9000, scoped, tag = 'internal scratch']
  %s0 = inlined_call_operand.vmem [shape: f32[25,25,8], index: 0, kind: input, shape index: {}]
  %s1 = inlined_call_operand.vmem [shape: f32[4,9,8], index: 1, kind: output, shape index: {}]
  %s2 = sld [smem:[#allocation0]]
  $region14: #{tpu_custom_call.1} parent=0
    _
  %s4 = ssub.s32 1, %s2
  %s5 = scalar_select 0, %s4, %s2
  // Predicated region
  $region2: #{tpu_custom_call.1} parent=0 // pred_check
    _
  $region3: #{tpu_custom_call.1} parent=0 // pred_check_branch
    %7 = sbr.rel (0) target = $region5
  $region4: #{tpu_custom_call.1} parent=0 // pred_region
    _
  $region5: #{tpu_custom_call.1} parent=0 // pred_fallthru
    _
  %v8 = vld [vmem:[%s0] sm:$0xff]
  %v9 = vld [vmem:[%s0 + $0x8] sm:$0xff]
  %v10 = vld [vmem:[%s0 + $0x10] sm:$0xff]
  %v11 = vld [vmem:[%s0 + $0x18] sm:$0x1]
  %v12 = vperm.slane %v8, 0
  %v13 = vsub.f32 %v8, %v12
  %v14 = vsub.f32 %v9, %v12
  %v15 = vsub.f32 %v10, %v12
  %v16 = vsub.f32 %v11, %v12
  %v17 = vmul.f32 %v13, %v13
  %v18 = vmul.f32 %v14, %v14
  %v19 = vmul.f32 %v15, %v15
  %v20 = vmul.f32 %v16, %v16
  %s21 = scalar_lea.vmem %s0, 32
  %v22 = vld [vmem:[%s21] sm:$0xff]
  %v23 = vld [vmem:[%s21 + $0x8] sm:$0xff]
  %v24 = vld [vmem:[%s21 + $0x10] sm:$0xff]
  %v25 = vld [vmem:[%s21 + $0x18] sm:$0x1]
  %v26 = vsub.f32 %v22, %v12
  %v27 = vsub.f32 %v23, %v12
  %v28 = vsub.f32 %v24, %v12
  %v29 = vsub.f32 %v25, %v12
  %v30 = vmul.f32 %v26, %v26
  %v31 = vmul.f32 %v27, %v27
  %v32 = vmul.f32 %v28, %v28
  %v33 = vmul.f32 %v29, %v29
  %v34 = vadd.f32 %v13, %v26
  %v35 = vadd.f32 %v14, %v27
  %v36 = vadd.f32 %v15, %v28
  %v37 = vadd.f32 %v16, %v29
  %v38 = vadd.f32 %v17, %v30
  %v39 = vadd.f32 %v18, %v31
  %v40 = vadd.f32 %v19, %v32
  %v41 = vadd.f32 %v20, %v33
  %v42 = vmax.f32 %v13, %v26
  %v43 = vmax.f32 %v14, %v27
  %v44 = vmax.f32 %v15, %v28
  %v45 = vmax.f32 %v16, %v29
  %v46 = vmin.f32 %v13, %v26
  %v47 = vmin.f32 %v14, %v27
  %v48 = vmin.f32 %v15, %v28
  %v49 = vmin.f32 %v16, %v29
  %s50 = scalar_lea.vmem %s0, 64
  %v51 = vld [vmem:[%s50] sm:$0xff]
  %v52 = vld [vmem:[%s50 + $0x8] sm:$0xff]
  %v53 = vld [vmem:[%s50 + $0x10] sm:$0xff]
  %v54 = vld [vmem:[%s50 + $0x18] sm:$0x1]
  %v55 = vsub.f32 %v51, %v12
  %v56 = vsub.f32 %v52, %v12
  %v57 = vsub.f32 %v53, %v12
  %v58 = vsub.f32 %v54, %v12
  %v59 = vmul.f32 %v55, %v55
  %v60 = vmul.f32 %v56, %v56
  %v61 = vmul.f32 %v57, %v57
  %v62 = vmul.f32 %v58, %v58
  %v63 = vadd.f32 %v34, %v55
  %v64 = vadd.f32 %v35, %v56
  %v65 = vadd.f32 %v36, %v57
  %v66 = vadd.f32 %v37, %v58
  %v67 = vadd.f32 %v38, %v59
  %v68 = vadd.f32 %v39, %v60
  %v69 = vadd.f32 %v40, %v61
  %v70 = vadd.f32 %v41, %v62
  %v71 = vmax.f32 %v42, %v55
  %v72 = vmax.f32 %v43, %v56
  %v73 = vmax.f32 %v44, %v57
  %v74 = vmax.f32 %v45, %v58
  %v75 = vmin.f32 %v46, %v55
  %v76 = vmin.f32 %v47, %v56
  %v77 = vmin.f32 %v48, %v57
  %v78 = vmin.f32 %v49, %v58
  %s79 = scalar_lea.vmem %s0, 96
  %v80 = vld [vmem:[%s79] sm:$0xff]
  %v81 = vld [vmem:[%s79 + $0x8] sm:$0xff]
  %v82 = vld [vmem:[%s79 + $0x10] sm:$0xff]
  %v83 = vld [vmem:[%s79 + $0x18] sm:$0x1]
  %v84 = vsub.f32 %v80, %v12
  %v85 = vsub.f32 %v81, %v12
  %v86 = vsub.f32 %v82, %v12
  %v87 = vsub.f32 %v83, %v12
  %v88 = vmul.f32 %v84, %v84
  %v89 = vmul.f32 %v85, %v85
  %v90 = vmul.f32 %v86, %v86
  %v91 = vmul.f32 %v87, %v87
  %v92 = vadd.f32 %v63, %v84
  %v93 = vadd.f32 %v64, %v85
  %v94 = vadd.f32 %v65, %v86
  %v95 = vadd.f32 %v66, %v87
  %v96 = vadd.f32 %v67, %v88
  %v97 = vadd.f32 %v68, %v89
  %v98 = vadd.f32 %v69, %v90
  %v99 = vadd.f32 %v70, %v91
  %v100 = vmax.f32 %v71, %v84
  %v101 = vmax.f32 %v72, %v85
  %v102 = vmax.f32 %v73, %v86
  %v103 = vmax.f32 %v74, %v87
  %v104 = vmin.f32 %v75, %v84
  %v105 = vmin.f32 %v76, %v85
  %v106 = vmin.f32 %v77, %v86
  %v107 = vmin.f32 %v78, %v87
  %s108 = scalar_lea.vmem %s0, 128
  %v109 = vld [vmem:[%s108] sm:$0xff]
  %v110 = vld [vmem:[%s108 + $0x8] sm:$0xff]
  %v111 = vld [vmem:[%s108 + $0x10] sm:$0xff]
  %v112 = vld [vmem:[%s108 + $0x18] sm:$0x1]
  %v113 = vsub.f32 %v109, %v12
  %v114 = vsub.f32 %v110, %v12
  %v115 = vsub.f32 %v111, %v12
  %v116 = vsub.f32 %v112, %v12
  %v117 = vmul.f32 %v113, %v113
  %v118 = vmul.f32 %v114, %v114
  %v119 = vmul.f32 %v115, %v115
  %v120 = vmul.f32 %v116, %v116
  %s121 = scalar_lea.vmem %s0, 160
  %v122 = vld [vmem:[%s121] sm:$0xff]
  %v123 = vld [vmem:[%s121 + $0x8] sm:$0xff]
  %v124 = vld [vmem:[%s121 + $0x10] sm:$0xff]
  %v125 = vld [vmem:[%s121 + $0x18] sm:$0x1]
  %v126 = vsub.f32 %v122, %v12
  %v127 = vsub.f32 %v123, %v12
  %v128 = vsub.f32 %v124, %v12
  %v129 = vsub.f32 %v125, %v12
  %v130 = vmul.f32 %v126, %v126
  %v131 = vmul.f32 %v127, %v127
  %v132 = vmul.f32 %v128, %v128
  %v133 = vmul.f32 %v129, %v129
  %v134 = vadd.f32 %v113, %v126
  %v135 = vadd.f32 %v114, %v127
  %v136 = vadd.f32 %v115, %v128
  %v137 = vadd.f32 %v116, %v129
  %v138 = vadd.f32 %v117, %v130
  %v139 = vadd.f32 %v118, %v131
  %v140 = vadd.f32 %v119, %v132
  %v141 = vadd.f32 %v120, %v133
  %v142 = vmax.f32 %v113, %v126
  %v143 = vmax.f32 %v114, %v127
  %v144 = vmax.f32 %v115, %v128
  %v145 = vmax.f32 %v116, %v129
  %v146 = vmin.f32 %v113, %v126
  %v147 = vmin.f32 %v114, %v127
  %v148 = vmin.f32 %v115, %v128
  %v149 = vmin.f32 %v116, %v129
  %s150 = scalar_lea.vmem %s0, 192
  %v151 = vld [vmem:[%s150] sm:$0xff]
  %v152 = vld [vmem:[%s150 + $0x8] sm:$0xff]
  %v153 = vld [vmem:[%s150 + $0x10] sm:$0xff]
  %v154 = vld [vmem:[%s150 + $0x18] sm:$0x1]
  %v155 = vsub.f32 %v151, %v12
  %v156 = vsub.f32 %v152, %v12
  %v157 = vsub.f32 %v153, %v12
  %v158 = vsub.f32 %v154, %v12
  %v159 = vmul.f32 %v155, %v155
  %v160 = vmul.f32 %v156, %v156
  %v161 = vmul.f32 %v157, %v157
  %v162 = vmul.f32 %v158, %v158
  %v163 = vadd.f32 %v134, %v155
  %v164 = vadd.f32 %v135, %v156
  %v165 = vadd.f32 %v136, %v157
  %v166 = vadd.f32 %v137, %v158
  %v167 = vadd.f32 %v138, %v159
  %v168 = vadd.f32 %v139, %v160
  %v169 = vadd.f32 %v140, %v161
  %v170 = vadd.f32 %v141, %v162
  %v171 = vmax.f32 %v142, %v155
  %v172 = vmax.f32 %v143, %v156
  %v173 = vmax.f32 %v144, %v157
  %v174 = vmax.f32 %v145, %v158
  %v175 = vmin.f32 %v146, %v155
  %v176 = vmin.f32 %v147, %v156
  %v177 = vmin.f32 %v148, %v157
  %v178 = vmin.f32 %v149, %v158
  %s179 = scalar_lea.vmem %s0, 224
  %v180 = vld [vmem:[%s179] sm:$0xff]
  %v181 = vld [vmem:[%s179 + $0x8] sm:$0xff]
  %v182 = vld [vmem:[%s179 + $0x10] sm:$0xff]
  %v183 = vld [vmem:[%s179 + $0x18] sm:$0x1]
  %v184 = vsub.f32 %v180, %v12
  %v185 = vsub.f32 %v181, %v12
  %v186 = vsub.f32 %v182, %v12
  %v187 = vsub.f32 %v183, %v12
  %v188 = vmul.f32 %v184, %v184
  %v189 = vmul.f32 %v185, %v185
  %v190 = vmul.f32 %v186, %v186
  %v191 = vmul.f32 %v187, %v187
  %v192 = vadd.f32 %v163, %v184
  %v193 = vadd.f32 %v164, %v185
  %v194 = vadd.f32 %v165, %v186
  %v195 = vadd.f32 %v166, %v187
  %v196 = vadd.f32 %v167, %v188
  %v197 = vadd.f32 %v168, %v189
  %v198 = vadd.f32 %v169, %v190
  %v199 = vadd.f32 %v170, %v191
  %v200 = vmax.f32 %v171, %v184
  %v201 = vmax.f32 %v172, %v185
  %v202 = vmax.f32 %v173, %v186
  %v203 = vmax.f32 %v174, %v187
  %v204 = vmin.f32 %v175, %v184
  %v205 = vmin.f32 %v176, %v185
  %v206 = vmin.f32 %v177, %v186
  %v207 = vmin.f32 %v178, %v187
  %s208 = scalar_lea.vmem %s0, 256
  %v209 = vld [vmem:[%s208] sm:$0xff]
  %v210 = vld [vmem:[%s208 + $0x8] sm:$0xff]
  %v211 = vld [vmem:[%s208 + $0x10] sm:$0xff]
  %v212 = vld [vmem:[%s208 + $0x18] sm:$0x1]
  %v213 = vsub.f32 %v209, %v12
  %v214 = vsub.f32 %v210, %v12
  %v215 = vsub.f32 %v211, %v12
  %v216 = vsub.f32 %v212, %v12
  %v217 = vmul.f32 %v213, %v213
  %v218 = vmul.f32 %v214, %v214
  %v219 = vmul.f32 %v215, %v215
  %v220 = vmul.f32 %v216, %v216
  %s221 = scalar_lea.vmem %s0, 288
  %v222 = vld [vmem:[%s221] sm:$0xff]
  %v223 = vld [vmem:[%s221 + $0x8] sm:$0xff]
  %v224 = vld [vmem:[%s221 + $0x10] sm:$0xff]
  %v225 = vld [vmem:[%s221 + $0x18] sm:$0x1]
  %v226 = vsub.f32 %v222, %v12
  %v227 = vsub.f32 %v223, %v12
  %v228 = vsub.f32 %v224, %v12
  %v229 = vsub.f32 %v225, %v12
  %v230 = vmul.f32 %v226, %v226
  %v231 = vmul.f32 %v227, %v227
  %v232 = vmul.f32 %v228, %v228
  %v233 = vmul.f32 %v229, %v229
  %v234 = vadd.f32 %v213, %v226
  %v235 = vadd.f32 %v214, %v227
  %v236 = vadd.f32 %v215, %v228
  %v237 = vadd.f32 %v216, %v229
  %v238 = vadd.f32 %v217, %v230
  %v239 = vadd.f32 %v218, %v231
  %v240 = vadd.f32 %v219, %v232
  %v241 = vadd.f32 %v220, %v233
  %v242 = vmax.f32 %v213, %v226
  %v243 = vmax.f32 %v214, %v227
  %v244 = vmax.f32 %v215, %v228
  %v245 = vmax.f32 %v216, %v229
  %v246 = vmin.f32 %v213, %v226
  %v247 = vmin.f32 %v214, %v227
  %v248 = vmin.f32 %v215, %v228
  %v249 = vmin.f32 %v216, %v229
  %s250 = scalar_lea.vmem %s0, 320
  %v251 = vld [vmem:[%s250] sm:$0xff]
  %v252 = vld [vmem:[%s250 + $0x8] sm:$0xff]
  %v253 = vld [vmem:[%s250 + $0x10] sm:$0xff]
  %v254 = vld [vmem:[%s250 + $0x18] sm:$0x1]
  %v255 = vsub.f32 %v251, %v12
  %v256 = vsub.f32 %v252, %v12
  %v257 = vsub.f32 %v253, %v12
  %v258 = vsub.f32 %v254, %v12
  %v259 = vmul.f32 %v255, %v255
  %v260 = vmul.f32 %v256, %v256
  %v261 = vmul.f32 %v257, %v257
  %v262 = vmul.f32 %v258, %v258
  %v263 = vadd.f32 %v234, %v255
  %v264 = vadd.f32 %v235, %v256
  %v265 = vadd.f32 %v236, %v257
  %v266 = vadd.f32 %v237, %v258
  %v267 = vadd.f32 %v238, %v259
  %v268 = vadd.f32 %v239, %v260
  %v269 = vadd.f32 %v240, %v261
  %v270 = vadd.f32 %v241, %v262
  %v271 = vmax.f32 %v242, %v255
  %v272 = vmax.f32 %v243, %v256
  %v273 = vmax.f32 %v244, %v257
  %v274 = vmax.f32 %v245, %v258
  %v275 = vmin.f32 %v246, %v255
  %v276 = vmin.f32 %v247, %v256
  %v277 = vmin.f32 %v248, %v257
  %v278 = vmin.f32 %v249, %v258
  %s279 = scalar_lea.vmem %s0, 352
  %v280 = vld [vmem:[%s279] sm:$0xff]
  %v281 = vld [vmem:[%s279 + $0x8] sm:$0xff]
  %v282 = vld [vmem:[%s279 + $0x10] sm:$0xff]
  %v283 = vld [vmem:[%s279 + $0x18] sm:$0x1]
  %v284 = vsub.f32 %v280, %v12
  %v285 = vsub.f32 %v281, %v12
  %v286 = vsub.f32 %v282, %v12
  %v287 = vsub.f32 %v283, %v12
  %v288 = vmul.f32 %v284, %v284
  %v289 = vmul.f32 %v285, %v285
  %v290 = vmul.f32 %v286, %v286
  %v291 = vmul.f32 %v287, %v287
  %v292 = vadd.f32 %v263, %v284
  %v293 = vadd.f32 %v264, %v285
  %v294 = vadd.f32 %v265, %v286
  %v295 = vadd.f32 %v266, %v287
  %v296 = vadd.f32 %v267, %v288
  %v297 = vadd.f32 %v268, %v289
  %v298 = vadd.f32 %v269, %v290
  %v299 = vadd.f32 %v270, %v291
  %v300 = vmax.f32 %v271, %v284
  %v301 = vmax.f32 %v272, %v285
  %v302 = vmax.f32 %v273, %v286
  %v303 = vmax.f32 %v274, %v287
  %v304 = vmin.f32 %v275, %v284
  %v305 = vmin.f32 %v276, %v285
  %v306 = vmin.f32 %v277, %v286
  %v307 = vmin.f32 %v278, %v287
  %s308 = scalar_lea.vmem %s0, 384
  %v309 = vld [vmem:[%s308] sm:$0xff]
  %v310 = vld [vmem:[%s308 + $0x8] sm:$0xff]
  %v311 = vld [vmem:[%s308 + $0x10] sm:$0xff]
  %v312 = vld [vmem:[%s308 + $0x18] sm:$0x1]
  %v313 = vsub.f32 %v309, %v12
  %v314 = vsub.f32 %v310, %v12
  %v315 = vsub.f32 %v311, %v12
  %v316 = vsub.f32 %v312, %v12
  %v317 = vmul.f32 %v313, %v313
  %v318 = vmul.f32 %v314, %v314
  %v319 = vmul.f32 %v315, %v315
  %v320 = vmul.f32 %v316, %v316
  %s321 = scalar_lea.vmem %s0, 416
  %v322 = vld [vmem:[%s321] sm:$0xff]
  %v323 = vld [vmem:[%s321 + $0x8] sm:$0xff]
  %v324 = vld [vmem:[%s321 + $0x10] sm:$0xff]
  %v325 = vld [vmem:[%s321 + $0x18] sm:$0x1]
  %v326 = vsub.f32 %v322, %v12
  %v327 = vsub.f32 %v323, %v12
  %v328 = vsub.f32 %v324, %v12
  %v329 = vsub.f32 %v325, %v12
  %v330 = vmul.f32 %v326, %v326
  %v331 = vmul.f32 %v327, %v327
  %v332 = vmul.f32 %v328, %v328
  %v333 = vmul.f32 %v329, %v329
  %v334 = vadd.f32 %v313, %v326
  %v335 = vadd.f32 %v314, %v327
  %v336 = vadd.f32 %v315, %v328
  %v337 = vadd.f32 %v316, %v329
  %v338 = vadd.f32 %v317, %v330
  %v339 = vadd.f32 %v318, %v331
  %v340 = vadd.f32 %v319, %v332
  %v341 = vadd.f32 %v320, %v333
  %v342 = vmax.f32 %v313, %v326
  %v343 = vmax.f32 %v314, %v327
  %v344 = vmax.f32 %v315, %v328
  %v345 = vmax.f32 %v316, %v329
  %v346 = vmin.f32 %v313, %v326
  %v347 = vmin.f32 %v314, %v327
  %v348 = vmin.f32 %v315, %v328
  %v349 = vmin.f32 %v316, %v329
  %s350 = scalar_lea.vmem %s0, 448
  %v351 = vld [vmem:[%s350] sm:$0xff]
  %v352 = vld [vmem:[%s350 + $0x8] sm:$0xff]
  %v353 = vld [vmem:[%s350 + $0x10] sm:$0xff]
  %v354 = vld [vmem:[%s350 + $0x18] sm:$0x1]
  %v355 = vsub.f32 %v351, %v12
  %v356 = vsub.f32 %v352, %v12
  %v357 = vsub.f32 %v353, %v12
  %v358 = vsub.f32 %v354, %v12
  %v359 = vmul.f32 %v355, %v355
  %v360 = vmul.f32 %v356, %v356
  %v361 = vmul.f32 %v357, %v357
  %v362 = vmul.f32 %v358, %v358
  %v363 = vadd.f32 %v334, %v355
  %v364 = vadd.f32 %v335, %v356
  %v365 = vadd.f32 %v336, %v357
  %v366 = vadd.f32 %v337, %v358
  %v367 = vadd.f32 %v338, %v359
  %v368 = vadd.f32 %v339, %v360
  %v369 = vadd.f32 %v340, %v361
  %v370 = vadd.f32 %v341, %v362
  %v371 = vmax.f32 %v342, %v355
  %v372 = vmax.f32 %v343, %v356
  %v373 = vmax.f32 %v344, %v357
  %v374 = vmax.f32 %v345, %v358
  %v375 = vmin.f32 %v346, %v355
  %v376 = vmin.f32 %v347, %v356
  %v377 = vmin.f32 %v348, %v357
  %v378 = vmin.f32 %v349, %v358
  %s379 = scalar_lea.vmem %s0, 480
  %v380 = vld [vmem:[%s379] sm:$0xff]
  %v381 = vld [vmem:[%s379 + $0x8] sm:$0xff]
  %v382 = vld [vmem:[%s379 + $0x10] sm:$0xff]
  %v383 = vld [vmem:[%s379 + $0x18] sm:$0x1]
  %v384 = vsub.f32 %v380, %v12
  %v385 = vsub.f32 %v381, %v12
  %v386 = vsub.f32 %v382, %v12
  %v387 = vsub.f32 %v383, %v12
  %v388 = vmul.f32 %v384, %v384
  %v389 = vmul.f32 %v385, %v385
  %v390 = vmul.f32 %v386, %v386
  %v391 = vmul.f32 %v387, %v387
  %v392 = vadd.f32 %v363, %v384
  %v393 = vadd.f32 %v364, %v385
  %v394 = vadd.f32 %v365, %v386
  %v395 = vadd.f32 %v366, %v387
  %v396 = vadd.f32 %v367, %v388
  %v397 = vadd.f32 %v368, %v389
  %v398 = vadd.f32 %v369, %v390
  %v399 = vadd.f32 %v370, %v391
  %v400 = vmax.f32 %v371, %v384
  %v401 = vmax.f32 %v372, %v385
  %v402 = vmax.f32 %v373, %v386
  %v403 = vmax.f32 %v374, %v387
  %v404 = vmin.f32 %v375, %v384
  %v405 = vmin.f32 %v376, %v385
  %v406 = vmin.f32 %v377, %v386
  %v407 = vmin.f32 %v378, %v387
  %s408 = scalar_lea.vmem %s0, 512
  %v409 = vld [vmem:[%s408] sm:$0xff]
  %v410 = vld [vmem:[%s408 + $0x8] sm:$0xff]
  %v411 = vld [vmem:[%s408 + $0x10] sm:$0xff]
  %v412 = vld [vmem:[%s408 + $0x18] sm:$0x1]
  %v413 = vsub.f32 %v409, %v12
  %v414 = vsub.f32 %v410, %v12
  %v415 = vsub.f32 %v411, %v12
  %v416 = vsub.f32 %v412, %v12
  %v417 = vmul.f32 %v413, %v413
  %v418 = vmul.f32 %v414, %v414
  %v419 = vmul.f32 %v415, %v415
  %v420 = vmul.f32 %v416, %v416
  %s421 = scalar_lea.vmem %s0, 544
  %v422 = vld [vmem:[%s421] sm:$0xff]
  %v423 = vld [vmem:[%s421 + $0x8] sm:$0xff]
  %v424 = vld [vmem:[%s421 + $0x10] sm:$0xff]
  %v425 = vld [vmem:[%s421 + $0x18] sm:$0x1]
  %v426 = vsub.f32 %v422, %v12
  %v427 = vsub.f32 %v423, %v12
  %v428 = vsub.f32 %v424, %v12
  %v429 = vsub.f32 %v425, %v12
  %v430 = vmul.f32 %v426, %v426
  %v431 = vmul.f32 %v427, %v427
  %v432 = vmul.f32 %v428, %v428
  %v433 = vmul.f32 %v429, %v429
  %v434 = vadd.f32 %v413, %v426
  %v435 = vadd.f32 %v414, %v427
  %v436 = vadd.f32 %v415, %v428
  %v437 = vadd.f32 %v416, %v429
  %v438 = vadd.f32 %v417, %v430
  %v439 = vadd.f32 %v418, %v431
  %v440 = vadd.f32 %v419, %v432
  %v441 = vadd.f32 %v420, %v433
  %v442 = vmax.f32 %v413, %v426
  %v443 = vmax.f32 %v414, %v427
  %v444 = vmax.f32 %v415, %v428
  %v445 = vmax.f32 %v416, %v429
  %v446 = vmin.f32 %v413, %v426
  %v447 = vmin.f32 %v414, %v427
  %v448 = vmin.f32 %v415, %v428
  %v449 = vmin.f32 %v416, %v429
  %s450 = scalar_lea.vmem %s0, 576
  %v451 = vld [vmem:[%s450] sm:$0xff]
  %v452 = vld [vmem:[%s450 + $0x8] sm:$0xff]
  %v453 = vld [vmem:[%s450 + $0x10] sm:$0xff]
  %v454 = vld [vmem:[%s450 + $0x18] sm:$0x1]
  %v455 = vsub.f32 %v451, %v12
  %v456 = vsub.f32 %v452, %v12
  %v457 = vsub.f32 %v453, %v12
  %v458 = vsub.f32 %v454, %v12
  %v459 = vmul.f32 %v455, %v455
  %v460 = vmul.f32 %v456, %v456
  %v461 = vmul.f32 %v457, %v457
  %v462 = vmul.f32 %v458, %v458
  %v463 = vadd.f32 %v434, %v455
  %v464 = vadd.f32 %v435, %v456
  %v465 = vadd.f32 %v436, %v457
  %v466 = vadd.f32 %v437, %v458
  %v467 = vadd.f32 %v438, %v459
  %v468 = vadd.f32 %v439, %v460
  %v469 = vadd.f32 %v440, %v461
  %v470 = vadd.f32 %v441, %v462
  %v471 = vmax.f32 %v442, %v455
  %v472 = vmax.f32 %v443, %v456
  %v473 = vmax.f32 %v444, %v457
  %v474 = vmax.f32 %v445, %v458
  %v475 = vmin.f32 %v446, %v455
  %v476 = vmin.f32 %v447, %v456
  %v477 = vmin.f32 %v448, %v457
  %v478 = vmin.f32 %v449, %v458
  %s479 = scalar_lea.vmem %s0, 608
  %v480 = vld [vmem:[%s479] sm:$0xff]
  %v481 = vld [vmem:[%s479 + $0x8] sm:$0xff]
  %v482 = vld [vmem:[%s479 + $0x10] sm:$0xff]
  %v483 = vld [vmem:[%s479 + $0x18] sm:$0x1]
  %v484 = vsub.f32 %v480, %v12
  %v485 = vsub.f32 %v481, %v12
  %v486 = vsub.f32 %v482, %v12
  %v487 = vsub.f32 %v483, %v12
  %v488 = vmul.f32 %v484, %v484
  %v489 = vmul.f32 %v485, %v485
  %v490 = vmul.f32 %v486, %v486
  %v491 = vmul.f32 %v487, %v487
  %v492 = vadd.f32 %v463, %v484
  %v493 = vadd.f32 %v464, %v485
  %v494 = vadd.f32 %v465, %v486
  %v495 = vadd.f32 %v466, %v487
  %v496 = vadd.f32 %v467, %v488
  %v497 = vadd.f32 %v468, %v489
  %v498 = vadd.f32 %v469, %v490
  %v499 = vadd.f32 %v470, %v491
  %v500 = vmax.f32 %v471, %v484
  %v501 = vmax.f32 %v472, %v485
  %v502 = vmax.f32 %v473, %v486
  %v503 = vmax.f32 %v474, %v487
  %v504 = vmin.f32 %v475, %v484
  %v505 = vmin.f32 %v476, %v485
  %v506 = vmin.f32 %v477, %v486
  %v507 = vmin.f32 %v478, %v487
  %s508 = scalar_lea.vmem %s0, 640
  %v509 = vld [vmem:[%s508] sm:$0xff]
  %v510 = vld [vmem:[%s508 + $0x8] sm:$0xff]
  %v511 = vld [vmem:[%s508 + $0x10] sm:$0xff]
  %v512 = vld [vmem:[%s508 + $0x18] sm:$0x1]
  %v513 = vsub.f32 %v509, %v12
  %v514 = vsub.f32 %v510, %v12
  %v515 = vsub.f32 %v511, %v12
  %v516 = vsub.f32 %v512, %v12
  %v517 = vmul.f32 %v513, %v513
  %v518 = vmul.f32 %v514, %v514
  %v519 = vmul.f32 %v515, %v515
  %v520 = vmul.f32 %v516, %v516
  %s521 = scalar_lea.vmem %s0, 672
  %v522 = vld [vmem:[%s521] sm:$0xff]
  %v523 = vld [vmem:[%s521 + $0x8] sm:$0xff]
  %v524 = vld [vmem:[%s521 + $0x10] sm:$0xff]
  %v525 = vld [vmem:[%s521 + $0x18] sm:$0x1]
  %v526 = vsub.f32 %v522, %v12
  %v527 = vsub.f32 %v523, %v12
  %v528 = vsub.f32 %v524, %v12
  %v529 = vsub.f32 %v525, %v12
  %v530 = vmul.f32 %v526, %v526
  %v531 = vmul.f32 %v527, %v527
  %v532 = vmul.f32 %v528, %v528
  %v533 = vmul.f32 %v529, %v529
  %v534 = vadd.f32 %v513, %v526
  %v535 = vadd.f32 %v514, %v527
  %v536 = vadd.f32 %v515, %v528
  %v537 = vadd.f32 %v516, %v529
  %v538 = vadd.f32 %v517, %v530
  %v539 = vadd.f32 %v518, %v531
  %v540 = vadd.f32 %v519, %v532
  %v541 = vadd.f32 %v520, %v533
  %v542 = vmax.f32 %v513, %v526
  %v543 = vmax.f32 %v514, %v527
  %v544 = vmax.f32 %v515, %v528
  %v545 = vmax.f32 %v516, %v529
  %v546 = vmin.f32 %v513, %v526
  %v547 = vmin.f32 %v514, %v527
  %v548 = vmin.f32 %v515, %v528
  %v549 = vmin.f32 %v516, %v529
  %s550 = scalar_lea.vmem %s0, 704
  %v551 = vld [vmem:[%s550] sm:$0xff]
  %v552 = vld [vmem:[%s550 + $0x8] sm:$0xff]
  %v553 = vld [vmem:[%s550 + $0x10] sm:$0xff]
  %v554 = vld [vmem:[%s550 + $0x18] sm:$0x1]
  %v555 = vsub.f32 %v551, %v12
  %v556 = vsub.f32 %v552, %v12
  %v557 = vsub.f32 %v553, %v12
  %v558 = vsub.f32 %v554, %v12
  %v559 = vmul.f32 %v555, %v555
  %v560 = vmul.f32 %v556, %v556
  %v561 = vmul.f32 %v557, %v557
  %v562 = vmul.f32 %v558, %v558
  %v563 = vadd.f32 %v534, %v555
  %v564 = vadd.f32 %v535, %v556
  %v565 = vadd.f32 %v536, %v557
  %v566 = vadd.f32 %v537, %v558
  %v567 = vadd.f32 %v538, %v559
  %v568 = vadd.f32 %v539, %v560
  %v569 = vadd.f32 %v540, %v561
  %v570 = vadd.f32 %v541, %v562
  %v571 = vmax.f32 %v542, %v555
  %v572 = vmax.f32 %v543, %v556
  %v573 = vmax.f32 %v544, %v557
  %v574 = vmax.f32 %v545, %v558
  %v575 = vmin.f32 %v546, %v555
  %v576 = vmin.f32 %v547, %v556
  %v577 = vmin.f32 %v548, %v557
  %v578 = vmin.f32 %v549, %v558
  %s579 = scalar_lea.vmem %s0, 736
  %v580 = vld [vmem:[%s579] sm:$0xff]
  %v581 = vld [vmem:[%s579 + $0x8] sm:$0xff]
  %v582 = vld [vmem:[%s579 + $0x10] sm:$0xff]
  %v583 = vld [vmem:[%s579 + $0x18] sm:$0x1]
  %v584 = vsub.f32 %v580, %v12
  %v585 = vsub.f32 %v581, %v12
  %v586 = vsub.f32 %v582, %v12
  %v587 = vsub.f32 %v583, %v12
  %v588 = vmul.f32 %v584, %v584
  %v589 = vmul.f32 %v585, %v585
  %v590 = vmul.f32 %v586, %v586
  %v591 = vmul.f32 %v587, %v587
  %v592 = vadd.f32 %v563, %v584
  %v593 = vadd.f32 %v564, %v585
  %v594 = vadd.f32 %v565, %v586
  %v595 = vadd.f32 %v566, %v587
  %v596 = vadd.f32 %v567, %v588
  %v597 = vadd.f32 %v568, %v589
  %v598 = vadd.f32 %v569, %v590
  %v599 = vadd.f32 %v570, %v591
  %v600 = vmax.f32 %v571, %v584
  %v601 = vmax.f32 %v572, %v585
  %v602 = vmax.f32 %v573, %v586
  %v603 = vmax.f32 %v574, %v587
  %v604 = vmin.f32 %v575, %v584
  %v605 = vmin.f32 %v576, %v585
  %v606 = vmin.f32 %v577, %v586
  %v607 = vmin.f32 %v578, %v587
  %v608 = vadd.f32 %v92, %v192
  %v609 = vadd.f32 %v93, %v193
  %v610 = vadd.f32 %v94, %v194
  %v611 = vadd.f32 %v95, %v195
  %v612 = vadd.f32 %v96, %v196
  %v613 = vadd.f32 %v97, %v197
  %v614 = vadd.f32 %v98, %v198
  %v615 = vadd.f32 %v99, %v199
  %v616 = vmax.f32 %v100, %v200
  %v617 = vmax.f32 %v101, %v201
  %v618 = vmax.f32 %v102, %v202
  %v619 = vmax.f32 %v103, %v203
  %v620 = vmin.f32 %v104, %v204
  %v621 = vmin.f32 %v105, %v205
  %v622 = vmin.f32 %v106, %v206
  %v623 = vmin.f32 %v107, %v207
  %v624 = vadd.f32 %v608, %v292
  %v625 = vadd.f32 %v609, %v293
  %v626 = vadd.f32 %v610, %v294
  %v627 = vadd.f32 %v611, %v295
  %v628 = vadd.f32 %v612, %v296
  %v629 = vadd.f32 %v613, %v297
  %v630 = vadd.f32 %v614, %v298
  %v631 = vadd.f32 %v615, %v299
  %v632 = vmax.f32 %v616, %v300
  %v633 = vmax.f32 %v617, %v301
  %v634 = vmax.f32 %v618, %v302
  %v635 = vmax.f32 %v619, %v303
  %v636 = vmin.f32 %v620, %v304
  %v637 = vmin.f32 %v621, %v305
  %v638 = vmin.f32 %v622, %v306
  %v639 = vmin.f32 %v623, %v307
  %v640 = vadd.f32 %v624, %v392
  %v641 = vadd.f32 %v625, %v393
  %v642 = vadd.f32 %v626, %v394
  %v643 = vadd.f32 %v627, %v395
  %v644 = vadd.f32 %v628, %v396
  %v645 = vadd.f32 %v629, %v397
  %v646 = vadd.f32 %v630, %v398
  %v647 = vadd.f32 %v631, %v399
  %v648 = vmax.f32 %v632, %v400
  %v649 = vmax.f32 %v633, %v401
  %v650 = vmax.f32 %v634, %v402
  %v651 = vmax.f32 %v635, %v403
  %v652 = vmin.f32 %v636, %v404
  %v653 = vmin.f32 %v637, %v405
  %v654 = vmin.f32 %v638, %v406
  %v655 = vmin.f32 %v639, %v407
  %v656 = vadd.f32 %v640, %v413
  %v657 = vadd.f32 %v641, %v414
  %v658 = vadd.f32 %v642, %v415
  %v659 = vadd.f32 %v643, %v416
  %v660 = vadd.f32 %v644, %v417
  %v661 = vadd.f32 %v645, %v418
  %v662 = vadd.f32 %v646, %v419
  %v663 = vadd.f32 %v647, %v420
  %v664 = vmax.f32 %v648, %v413
  %v665 = vmax.f32 %v649, %v414
  %v666 = vmax.f32 %v650, %v415
  %v667 = vmax.f32 %v651, %v416
  %v668 = vmin.f32 %v652, %v413
  %v669 = vmin.f32 %v653, %v414
  %v670 = vmin.f32 %v654, %v415
  %v671 = vmin.f32 %v655, %v416
  %vm672 = vcmask 64512
  %v673 = vsel %vm672, %v656, 0.0
  %v674 = vsel %vm672, %v657, 0.0
  %v675 = vadd.f32 %v673, %v674
  %vm676 = vcmask 57344
  %v677 = vsel %vm676, %v658, 0.0
  %v678 = vadd.f32 %v675, %v677
  %v679 = vrot.slane %v678, 4
  %v680 = vadd.f32 %v678, %v679
  %v681 = vrot.slane %v680, 2
  %v682 = vadd.f32 %v680, %v681
  %v683 = vrot.slane %v682, 1
  %v684 = vadd.f32 %v682, %v683
  %v685 = vsel %vm672, %v660, 0.0
  %v686 = vsel %vm672, %v661, 0.0
  %v687 = vadd.f32 %v685, %v686
  %v688 = vsel %vm676, %v662, 0.0
  %v689 = vadd.f32 %v687, %v688
  %v690 = vrot.slane %v689, 4
  %v691 = vadd.f32 %v689, %v690
  %v692 = vrot.slane %v691, 2
  %v693 = vadd.f32 %v691, %v692
  %v694 = vrot.slane %v693, 1
  %v695 = vadd.f32 %v693, %v694
  %v696 = vsel %vm672, %v664, -inf
  %v697 = vsel %vm672, %v665, -inf
  %v698 = vsel %vm676, %v666, -inf
  %v699 = vmax.f32 %v696, %v697
  %v700 = vmax.f32 %v699, %v698
  %v701 = vrot.slane %v700, 4
  %v702 = vmax.f32 %v700, %v701
  %v703 = vrot.slane %v702, 2
  %v704 = vmax.f32 %v702, %v703
  %v705 = vrot.slane %v704, 1
  %v706 = vmax.f32 %v704, %v705
  %v707 = vsel %vm672, %v668, inf
  %v708 = vsel %vm672, %v669, inf
  %v709 = vsel %vm676, %v670, inf
  %v710 = vmin.f32 %v707, %v708
  %v711 = vmin.f32 %v710, %v709
  %v712 = vrot.slane %v711, 4
  %v713 = vmin.f32 %v711, %v712
  %v714 = vrot.slane %v713, 2
  %v715 = vmin.f32 %v713, %v714
  %v716 = vrot.slane %v715, 1
  %v717 = vmin.f32 %v715, %v716
  %v718 = vmul.f32 %v684, 0.0034602077
  %v719 = vmul.f32 %v695, 0.0034602077
  %v720 = vmul.f32 %v718, %v718
  %v721 = vsub.f32 %v719, %v720
  %v722 = vmax.f32 %v721, 0.0
  %v723 = vrsqrt.pop %v722
  %v724 = vmul.f32 %v723, %v722
  %v725 = vmul.f32 %v724, %v723
  %v726 = vmul.f32 0.5, %v725
  %v727 = vsub.f32 1.5, %v726
  %v728 = vmul.f32 %v723, %v727
  %vm729 = vweird.f32 %v722
  %vm730 = vweird.f32 %v723
  %vm731 = vmor %vm729, %vm730
  %v732 = vsel %vm731, %v723, %v728
  %v733 = vadd.f32 %v718, %v8
  %v734 = vrsqrt.pop %v722
  %v735 = vmul.f32 %v734, %v722
  %v736 = vmul.f32 %v735, %v734
  %v737 = vmul.f32 0.5, %v736
  %v738 = vsub.f32 1.5, %v737
  %v739 = vmul.f32 %v734, %v738
  %v740 = vmul.f32 %v722, %v739
  %vm741 = vcmp.eq.f32.partialorder %v722, inf
  %v742 = vsel %vm741, %v722, %v740
  %vm743 = vcmp.eq.f32.partialorder %v722, 0.0
  %v744 = vand.u32 %v722, 2147483648
  %v745 = vsel %vm743, %v744, %v742
  %v746 = vsub.f32 %v706, %v718
  %v747 = vmul.f32 %v746, %v732
  %v748 = vsub.f32 %v718, %v717
  %v749 = vmul.f32 %v748, %v732
  %vm753 = vcmask 1043456
  %v754 = vrot.slane %v656, 4
  %v755 = vrot.slane %v657, 4
  %v756 = vsel %vm753, %v754, %v755
  %v757 = vrot.slane %v658, 4
  %v758 = vsel %vm753, %v755, %v757
  %v762 = vsel %vm672, %v756, 0.0
  %v763 = vsel %vm672, %v758, 0.0
  %v764 = vadd.f32 %v762, %v763
  %v765 = vsel %vm676, %v757, 0.0
  %v766 = vadd.f32 %v764, %v765
  %v767 = vrot.slane %v766, 4
  %v768 = vadd.f32 %v766, %v767
  %v769 = vrot.slane %v768, 2
  %v770 = vadd.f32 %v768, %v769
  %v771 = vrot.slane %v770, 1
  %v772 = vadd.f32 %v770, %v771
  %v776 = vrot.slane %v660, 4
  %v777 = vrot.slane %v661, 4
  %v778 = vsel %vm753, %v776, %v777
  %v779 = vrot.slane %v662, 4
  %v780 = vsel %vm753, %v777, %v779
  %v784 = vsel %vm672, %v778, 0.0
  %v785 = vsel %vm672, %v780, 0.0
  %v786 = vadd.f32 %v784, %v785
  %v787 = vsel %vm676, %v779, 0.0
  %v788 = vadd.f32 %v786, %v787
  %v789 = vrot.slane %v788, 4
  %v790 = vadd.f32 %v788, %v789
  %v791 = vrot.slane %v790, 2
  %v792 = vadd.f32 %v790, %v791
  %v793 = vrot.slane %v792, 1
  %v794 = vadd.f32 %v792, %v793
  %vm795 = vcmask 64516
  %v796 = vsel %vm795, %v664, -inf
  %vm797 = vcmask 61440
  %v798 = vsel %vm797, %v666, -inf
  %v799 = vmax.f32 %v796, %v697
  %v800 = vmax.f32 %v799, %v798
  %v801 = vrot.slane %v800, 4
  %v802 = vmax.f32 %v800, %v801
  %v803 = vrot.slane %v802, 2
  %v804 = vmax.f32 %v802, %v803
  %v805 = vrot.slane %v804, 1
  %v806 = vmax.f32 %v804, %v805
  %v807 = vsel %vm795, %v668, inf
  %v808 = vsel %vm797, %v670, inf
  %v809 = vmin.f32 %v807, %v708
  %v810 = vmin.f32 %v809, %v808
  %v811 = vrot.slane %v810, 4
  %v812 = vmin.f32 %v810, %v811
  %v813 = vrot.slane %v812, 2
  %v814 = vmin.f32 %v812, %v813
  %v815 = vrot.slane %v814, 1
  %v816 = vmin.f32 %v814, %v815
  %v817 = vmul.f32 %v772, 0.0034602077
  %v818 = vmul.f32 %v794, 0.0034602077
  %v819 = vmul.f32 %v817, %v817
  %v820 = vsub.f32 %v818, %v819
  %v821 = vmax.f32 %v820, 0.0
  %v822 = vrsqrt.pop %v821
  %v823 = vmul.f32 %v822, %v821
  %v824 = vmul.f32 %v823, %v822
  %v825 = vmul.f32 0.5, %v824
  %v826 = vsub.f32 1.5, %v825
  %v827 = vmul.f32 %v822, %v826
  %vm828 = vweird.f32 %v821
  %vm829 = vweird.f32 %v822
  %vm830 = vmor %vm828, %vm829
  %v831 = vsel %vm830, %v822, %v827
  %v832 = vadd.f32 %v817, %v8
  %v833 = vrsqrt.pop %v821
  %v834 = vmul.f32 %v833, %v821
  %v835 = vmul.f32 %v834, %v833
  %v836 = vmul.f32 0.5, %v835
  %v837 = vsub.f32 1.5, %v836
  %v838 = vmul.f32 %v833, %v837
  %v839 = vmul.f32 %v821, %v838
  %vm840 = vcmp.eq.f32.partialorder %v821, inf
  %v841 = vsel %vm840, %v821, %v839
  %vm842 = vcmp.eq.f32.partialorder %v821, 0.0
  %v843 = vand.u32 %v821, 2147483648
  %v844 = vsel %vm842, %v843, %v841
  %v845 = vsub.f32 %v806, %v817
  %v846 = vmul.f32 %v845, %v831
  %v847 = vsub.f32 %v817, %v816
  %v848 = vmul.f32 %v847, %v831
  %v849 = vsel %vm672, %v658, 0.0
  %v850 = vadd.f32 %v674, %v849
  %v851 = vsel %vm676, %v659, 0.0
  %v852 = vadd.f32 %v850, %v851
  %v853 = vrot.slane %v852, 4
  %v854 = vadd.f32 %v852, %v853
  %v855 = vrot.slane %v854, 2
  %v856 = vadd.f32 %v854, %v855
  %v857 = vrot.slane %v856, 1
  %v858 = vadd.f32 %v856, %v857
  %v859 = vsel %vm672, %v662, 0.0
  %v860 = vadd.f32 %v686, %v859
  %v861 = vsel %vm676, %v663, 0.0
  %v862 = vadd.f32 %v860, %v861
  %v863 = vrot.slane %v862, 4
  %v864 = vadd.f32 %v862, %v863
  %v865 = vrot.slane %v864, 2
  %v866 = vadd.f32 %v864, %v865
  %v867 = vrot.slane %v866, 1
  %v868 = vadd.f32 %v866, %v867
  %v869 = vsel %vm672, %v666, -inf
  %v870 = vsel %vm676, %v667, -inf
  %v871 = vmax.f32 %v697, %v869
  %v872 = vmax.f32 %v871, %v870
  %v873 = vrot.slane %v872, 4
  %v874 = vmax.f32 %v872, %v873
  %v875 = vrot.slane %v874, 2
  %v876 = vmax.f32 %v874, %v875
  %v877 = vrot.slane %v876, 1
  %v878 = vmax.f32 %v876, %v877
  %v879 = vsel %vm672, %v670, inf
  %v880 = vsel %vm676, %v671, inf
  %v881 = vmin.f32 %v708, %v879
  %v882 = vmin.f32 %v881, %v880
  %v883 = vrot.slane %v882, 4
  %v884 = vmin.f32 %v882, %v883
  %v885 = vrot.slane %v884, 2
  %v886 = vmin.f32 %v884, %v885
  %v887 = vrot.slane %v886, 1
  %v888 = vmin.f32 %v886, %v887
  %v889 = vmul.f32 %v858, 0.0034602077
  %v890 = vmul.f32 %v868, 0.0034602077
  %v891 = vmul.f32 %v889, %v889
  %v892 = vsub.f32 %v890, %v891
  %v893 = vmax.f32 %v892, 0.0
  %v894 = vrsqrt.pop %v893
  %v895 = vmul.f32 %v894, %v893
  %v896 = vmul.f32 %v895, %v894
  %v897 = vmul.f32 0.5, %v896
  %v898 = vsub.f32 1.5, %v897
  %v899 = vmul.f32 %v894, %v898
  %vm900 = vweird.f32 %v893
  %vm901 = vweird.f32 %v894
  %vm902 = vmor %vm900, %vm901
  %v903 = vsel %vm902, %v894, %v899
  %v904 = vadd.f32 %v889, %v8
  %v905 = vrsqrt.pop %v893
  %v906 = vmul.f32 %v905, %v893
  %v907 = vmul.f32 %v906, %v905
  %v908 = vmul.f32 0.5, %v907
  %v909 = vsub.f32 1.5, %v908
  %v910 = vmul.f32 %v905, %v909
  %v911 = vmul.f32 %v893, %v910
  %vm912 = vcmp.eq.f32.partialorder %v893, inf
  %v913 = vsel %vm912, %v893, %v911
  %vm914 = vcmp.eq.f32.partialorder %v893, 0.0
  %v915 = vand.u32 %v893, 2147483648
  %v916 = vsel %vm914, %v915, %v913
  %v917 = vsub.f32 %v878, %v889
  %v918 = vmul.f32 %v917, %v903
  %v919 = vsub.f32 %v889, %v888
  %v920 = vmul.f32 %v919, %v903
  %v921 = vadd.f32 %v192, %v292
  %v922 = vadd.f32 %v193, %v293
  %v923 = vadd.f32 %v194, %v294
  %v924 = vadd.f32 %v195, %v295
  %v925 = vadd.f32 %v196, %v296
  %v926 = vadd.f32 %v197, %v297
  %v927 = vadd.f32 %v198, %v298
  %v928 = vadd.f32 %v199, %v299
  %v929 = vmax.f32 %v200, %v300
  %v930 = vmax.f32 %v201, %v301
  %v931 = vmax.f32 %v202, %v302
  %v932 = vmax.f32 %v203, %v303
  %v933 = vmin.f32 %v204, %v304
  %v934 = vmin.f32 %v205, %v305
  %v935 = vmin.f32 %v206, %v306
  %v936 = vmin.f32 %v207, %v307
  %v937 = vadd.f32 %v921, %v392
  %v938 = vadd.f32 %v922, %v393
  %v939 = vadd.f32 %v923, %v394
  %v940 = vadd.f32 %v924, %v395
  %v941 = vadd.f32 %v925, %v396
  %v942 = vadd.f32 %v926, %v397
  %v943 = vadd.f32 %v927, %v398
  %v944 = vadd.f32 %v928, %v399
  %v945 = vmax.f32 %v929, %v400
  %v946 = vmax.f32 %v930, %v401
  %v947 = vmax.f32 %v931, %v402
  %v948 = vmax.f32 %v932, %v403
  %v949 = vmin.f32 %v933, %v404
  %v950 = vmin.f32 %v934, %v405
  %v951 = vmin.f32 %v935, %v406
  %v952 = vmin.f32 %v936, %v407
  %v953 = vadd.f32 %v937, %v492
  %v954 = vadd.f32 %v938, %v493
  %v955 = vadd.f32 %v939, %v494
  %v956 = vadd.f32 %v940, %v495
  %v957 = vadd.f32 %v941, %v496
  %v958 = vadd.f32 %v942, %v497
  %v959 = vadd.f32 %v943, %v498
  %v960 = vadd.f32 %v944, %v499
  %v961 = vmax.f32 %v945, %v500
  %v962 = vmax.f32 %v946, %v501
  %v963 = vmax.f32 %v947, %v502
  %v964 = vmax.f32 %v948, %v503
  %v965 = vmin.f32 %v949, %v504
  %v966 = vmin.f32 %v950, %v505
  %v967 = vmin.f32 %v951, %v506
  %v968 = vmin.f32 %v952, %v507
  %v969 = vadd.f32 %v953, %v513
  %v970 = vadd.f32 %v954, %v514
  %v971 = vadd.f32 %v955, %v515
  %v972 = vadd.f32 %v956, %v516
  %v973 = vadd.f32 %v957, %v517
  %v974 = vadd.f32 %v958, %v518
  %v975 = vadd.f32 %v959, %v519
  %v976 = vadd.f32 %v960, %v520
  %v977 = vmax.f32 %v961, %v513
  %v978 = vmax.f32 %v962, %v514
  %v979 = vmax.f32 %v963, %v515
  %v980 = vmax.f32 %v964, %v516
  %v981 = vmin.f32 %v965, %v513
  %v982 = vmin.f32 %v966, %v514
  %v983 = vmin.f32 %v967, %v515
  %v984 = vmin.f32 %v968, %v516
  %v985 = vsel %vm672, %v969, 0.0
  %v986 = vsel %vm672, %v970, 0.0
  %v987 = vadd.f32 %v985, %v986
  %v988 = vsel %vm676, %v971, 0.0
  %v989 = vadd.f32 %v987, %v988
  %v990 = vrot.slane %v989, 4
  %v991 = vadd.f32 %v989, %v990
  %v992 = vrot.slane %v991, 2
  %v993 = vadd.f32 %v991, %v992
  %v994 = vrot.slane %v993, 1
  %v995 = vadd.f32 %v993, %v994
  %v996 = vsel %vm672, %v973, 0.0
  %v997 = vsel %vm672, %v974, 0.0
  %v998 = vadd.f32 %v996, %v997
  %v999 = vsel %vm676, %v975, 0.0
  %v1000 = vadd.f32 %v998, %v999
  %v1001 = vrot.slane %v1000, 4
  %v1002 = vadd.f32 %v1000, %v1001
  %v1003 = vrot.slane %v1002, 2
  %v1004 = vadd.f32 %v1002, %v1003
  %v1005 = vrot.slane %v1004, 1
  %v1006 = vadd.f32 %v1004, %v1005
  %v1007 = vsel %vm672, %v977, -inf
  %v1008 = vsel %vm672, %v978, -inf
  %v1009 = vsel %vm676, %v979, -inf
  %v1010 = vmax.f32 %v1007, %v1008
  %v1011 = vmax.f32 %v1010, %v1009
  %v1012 = vrot.slane %v1011, 4
  %v1013 = vmax.f32 %v1011, %v1012
  %v1014 = vrot.slane %v1013, 2
  %v1015 = vmax.f32 %v1013, %v1014
  %v1016 = vrot.slane %v1015, 1
  %v1017 = vmax.f32 %v1015, %v1016
  %v1018 = vsel %vm672, %v981, inf
  %v1019 = vsel %vm672, %v982, inf
  %v1020 = vsel %vm676, %v983, inf
  %v1021 = vmin.f32 %v1018, %v1019
  %v1022 = vmin.f32 %v1021, %v1020
  %v1023 = vrot.slane %v1022, 4
  %v1024 = vmin.f32 %v1022, %v1023
  %v1025 = vrot.slane %v1024, 2
  %v1026 = vmin.f32 %v1024, %v1025
  %v1027 = vrot.slane %v1026, 1
  %v1028 = vmin.f32 %v1026, %v1027
  %v1029 = vmul.f32 %v995, 0.0034602077
  %v1030 = vmul.f32 %v1006, 0.0034602077
  %v1031 = vmul.f32 %v1029, %v1029
  %v1032 = vsub.f32 %v1030, %v1031
  %v1033 = vmax.f32 %v1032, 0.0
  %v1034 = vrsqrt.pop %v1033
  %v1035 = vmul.f32 %v1034, %v1033
  %v1036 = vmul.f32 %v1035, %v1034
  %v1037 = vmul.f32 0.5, %v1036
  %v1038 = vsub.f32 1.5, %v1037
  %v1039 = vmul.f32 %v1034, %v1038
  %vm1040 = vweird.f32 %v1033
  %vm1041 = vweird.f32 %v1034
  %vm1042 = vmor %vm1040, %vm1041
  %v1043 = vsel %vm1042, %v1034, %v1039
  %v1044 = vadd.f32 %v1029, %v8
  %v1045 = vrsqrt.pop %v1033
  %v1046 = vmul.f32 %v1045, %v1033
  %v1047 = vmul.f32 %v1046, %v1045
  %v1048 = vmul.f32 0.5, %v1047
  %v1049 = vsub.f32 1.5, %v1048
  %v1050 = vmul.f32 %v1045, %v1049
  %v1051 = vmul.f32 %v1033, %v1050
  %vm1052 = vcmp.eq.f32.partialorder %v1033, inf
  %v1053 = vsel %vm1052, %v1033, %v1051
  %vm1054 = vcmp.eq.f32.partialorder %v1033, 0.0
  %v1055 = vand.u32 %v1033, 2147483648
  %v1056 = vsel %vm1054, %v1055, %v1053
  %v1057 = vsub.f32 %v1017, %v1029
  %v1058 = vmul.f32 %v1057, %v1043
  %v1059 = vsub.f32 %v1029, %v1028
  %v1060 = vmul.f32 %v1059, %v1043
  %v1064 = vrot.slane %v969, 4
  %v1065 = vrot.slane %v970, 4
  %v1066 = vsel %vm753, %v1064, %v1065
  %v1067 = vrot.slane %v971, 4
  %v1068 = vsel %vm753, %v1065, %v1067
  %v1072 = vsel %vm672, %v1066, 0.0
  %v1073 = vsel %vm672, %v1068, 0.0
  %v1074 = vadd.f32 %v1072, %v1073
  %v1075 = vsel %vm676, %v1067, 0.0
  %v1076 = vadd.f32 %v1074, %v1075
  %v1077 = vrot.slane %v1076, 4
  %v1078 = vadd.f32 %v1076, %v1077
  %v1079 = vrot.slane %v1078, 2
  %v1080 = vadd.f32 %v1078, %v1079
  %v1081 = vrot.slane %v1080, 1
  %v1082 = vadd.f32 %v1080, %v1081
  %v1086 = vrot.slane %v973, 4
  %v1087 = vrot.slane %v974, 4
  %v1088 = vsel %vm753, %v1086, %v1087
  %v1089 = vrot.slane %v975, 4
  %v1090 = vsel %vm753, %v1087, %v1089
  %v1094 = vsel %vm672, %v1088, 0.0
  %v1095 = vsel %vm672, %v1090, 0.0
  %v1096 = vadd.f32 %v1094, %v1095
  %v1097 = vsel %vm676, %v1089, 0.0
  %v1098 = vadd.f32 %v1096, %v1097
  %v1099 = vrot.slane %v1098, 4
  %v1100 = vadd.f32 %v1098, %v1099
  %v1101 = vrot.slane %v1100, 2
  %v1102 = vadd.f32 %v1100, %v1101
  %v1103 = vrot.slane %v1102, 1
  %v1104 = vadd.f32 %v1102, %v1103
  %v1105 = vsel %vm795, %v977, -inf
  %v1106 = vsel %vm797, %v979, -inf
  %v1107 = vmax.f32 %v1105, %v1008
  %v1108 = vmax.f32 %v1107, %v1106
  %v1109 = vrot.slane %v1108, 4
  %v1110 = vmax.f32 %v1108, %v1109
  %v1111 = vrot.slane %v1110, 2
  %v1112 = vmax.f32 %v1110, %v1111
  %v1113 = vrot.slane %v1112, 1
  %v1114 = vmax.f32 %v1112, %v1113
  %v1115 = vsel %vm795, %v981, inf
  %v1116 = vsel %vm797, %v983, inf
  %v1117 = vmin.f32 %v1115, %v1019
  %v1118 = vmin.f32 %v1117, %v1116
  %v1119 = vrot.slane %v1118, 4
  %v1120 = vmin.f32 %v1118, %v1119
  %v1121 = vrot.slane %v1120, 2
  %v1122 = vmin.f32 %v1120, %v1121
  %v1123 = vrot.slane %v1122, 1
  %v1124 = vmin.f32 %v1122, %v1123
  %v1125 = vmul.f32 %v1082, 0.0034602077
  %v1126 = vmul.f32 %v1104, 0.0034602077
  %v1127 = vmul.f32 %v1125, %v1125
  %v1128 = vsub.f32 %v1126, %v1127
  %v1129 = vmax.f32 %v1128, 0.0
  %v1130 = vrsqrt.pop %v1129
  %v1131 = vmul.f32 %v1130, %v1129
  %v1132 = vmul.f32 %v1131, %v1130
  %v1133 = vmul.f32 0.5, %v1132
  %v1134 = vsub.f32 1.5, %v1133
  %v1135 = vmul.f32 %v1130, %v1134
  %vm1136 = vweird.f32 %v1129
  %vm1137 = vweird.f32 %v1130
  %vm1138 = vmor %vm1136, %vm1137
  %v1139 = vsel %vm1138, %v1130, %v1135
  %v1140 = vadd.f32 %v1125, %v8
  %v1141 = vrsqrt.pop %v1129
  %v1142 = vmul.f32 %v1141, %v1129
  %v1143 = vmul.f32 %v1142, %v1141
  %v1144 = vmul.f32 0.5, %v1143
  %v1145 = vsub.f32 1.5, %v1144
  %v1146 = vmul.f32 %v1141, %v1145
  %v1147 = vmul.f32 %v1129, %v1146
  %vm1148 = vcmp.eq.f32.partialorder %v1129, inf
  %v1149 = vsel %vm1148, %v1129, %v1147
  %vm1150 = vcmp.eq.f32.partialorder %v1129, 0.0
  %v1151 = vand.u32 %v1129, 2147483648
  %v1152 = vsel %vm1150, %v1151, %v1149
  %v1153 = vsub.f32 %v1114, %v1125
  %v1154 = vmul.f32 %v1153, %v1139
  %v1155 = vsub.f32 %v1125, %v1124
  %v1156 = vmul.f32 %v1155, %v1139
  %v1157 = vsel %vm672, %v971, 0.0
  %v1158 = vadd.f32 %v986, %v1157
  %v1159 = vsel %vm676, %v972, 0.0
  %v1160 = vadd.f32 %v1158, %v1159
  %v1161 = vrot.slane %v1160, 4
  %v1162 = vadd.f32 %v1160, %v1161
  %v1163 = vrot.slane %v1162, 2
  %v1164 = vadd.f32 %v1162, %v1163
  %v1165 = vrot.slane %v1164, 1
  %v1166 = vadd.f32 %v1164, %v1165
  %v1167 = vsel %vm672, %v975, 0.0
  %v1168 = vadd.f32 %v997, %v1167
  %v1169 = vsel %vm676, %v976, 0.0
  %v1170 = vadd.f32 %v1168, %v1169
  %v1171 = vrot.slane %v1170, 4
  %v1172 = vadd.f32 %v1170, %v1171
  %v1173 = vrot.slane %v1172, 2
  %v1174 = vadd.f32 %v1172, %v1173
  %v1175 = vrot.slane %v1174, 1
  %v1176 = vadd.f32 %v1174, %v1175
  %v1177 = vsel %vm672, %v979, -inf
  %v1178 = vsel %vm676, %v980, -inf
  %v1179 = vmax.f32 %v1008, %v1177
  %v1180 = vmax.f32 %v1179, %v1178
  %v1181 = vrot.slane %v1180, 4
  %v1182 = vmax.f32 %v1180, %v1181
  %v1183 = vrot.slane %v1182, 2
  %v1184 = vmax.f32 %v1182, %v1183
  %v1185 = vrot.slane %v1184, 1
  %v1186 = vmax.f32 %v1184, %v1185
  %v1187 = vsel %vm672, %v983, inf
  %v1188 = vsel %vm676, %v984, inf
  %v1189 = vmin.f32 %v1019, %v1187
  %v1190 = vmin.f32 %v1189, %v1188
  %v1191 = vrot.slane %v1190, 4
  %v1192 = vmin.f32 %v1190, %v1191
  %v1193 = vrot.slane %v1192, 2
  %v1194 = vmin.f32 %v1192, %v1193
  %v1195 = vrot.slane %v1194, 1
  %v1196 = vmin.f32 %v1194, %v1195
  %v1197 = vmul.f32 %v1166, 0.0034602077
  %v1198 = vmul.f32 %v1176, 0.0034602077
  %v1199 = vmul.f32 %v1197, %v1197
  %v1200 = vsub.f32 %v1198, %v1199
  %v1201 = vmax.f32 %v1200, 0.0
  %v1202 = vrsqrt.pop %v1201
  %v1203 = vmul.f32 %v1202, %v1201
  %v1204 = vmul.f32 %v1203, %v1202
  %v1205 = vmul.f32 0.5, %v1204
  %v1206 = vsub.f32 1.5, %v1205
  %v1207 = vmul.f32 %v1202, %v1206
  %vm1208 = vweird.f32 %v1201
  %vm1209 = vweird.f32 %v1202
  %vm1210 = vmor %vm1208, %vm1209
  %v1211 = vsel %vm1210, %v1202, %v1207
  %v1212 = vadd.f32 %v1197, %v8
  %v1213 = vrsqrt.pop %v1201
  %v1214 = vmul.f32 %v1213, %v1201
  %v1215 = vmul.f32 %v1214, %v1213
  %v1216 = vmul.f32 0.5, %v1215
  %v1217 = vsub.f32 1.5, %v1216
  %v1218 = vmul.f32 %v1213, %v1217
  %v1219 = vmul.f32 %v1201, %v1218
  %vm1220 = vcmp.eq.f32.partialorder %v1201, inf
  %v1221 = vsel %vm1220, %v1201, %v1219
  %vm1222 = vcmp.eq.f32.partialorder %v1201, 0.0
  %v1223 = vand.u32 %v1201, 2147483648
  %v1224 = vsel %vm1222, %v1223, %v1221
  %v1225 = vsub.f32 %v1186, %v1197
  %v1226 = vmul.f32 %v1225, %v1211
  %v1227 = vsub.f32 %v1197, %v1196
  %v1228 = vmul.f32 %v1227, %v1211
  %v1229 = vadd.f32 %v292, %v392
  %v1230 = vadd.f32 %v293, %v393
  %v1231 = vadd.f32 %v294, %v394
  %v1232 = vadd.f32 %v295, %v395
  %v1233 = vadd.f32 %v296, %v396
  %v1234 = vadd.f32 %v297, %v397
  %v1235 = vadd.f32 %v298, %v398
  %v1236 = vadd.f32 %v299, %v399
  %v1237 = vmax.f32 %v300, %v400
  %v1238 = vmax.f32 %v301, %v401
  %v1239 = vmax.f32 %v302, %v402
  %v1240 = vmax.f32 %v303, %v403
  %v1241 = vmin.f32 %v304, %v404
  %v1242 = vmin.f32 %v305, %v405
  %v1243 = vmin.f32 %v306, %v406
  %v1244 = vmin.f32 %v307, %v407
  %v1245 = vadd.f32 %v1229, %v492
  %v1246 = vadd.f32 %v1230, %v493
  %v1247 = vadd.f32 %v1231, %v494
  %v1248 = vadd.f32 %v1232, %v495
  %v1249 = vadd.f32 %v1233, %v496
  %v1250 = vadd.f32 %v1234, %v497
  %v1251 = vadd.f32 %v1235, %v498
  %v1252 = vadd.f32 %v1236, %v499
  %v1253 = vmax.f32 %v1237, %v500
  %v1254 = vmax.f32 %v1238, %v501
  %v1255 = vmax.f32 %v1239, %v502
  %v1256 = vmax.f32 %v1240, %v503
  %v1257 = vmin.f32 %v1241, %v504
  %v1258 = vmin.f32 %v1242, %v505
  %v1259 = vmin.f32 %v1243, %v506
  %v1260 = vmin.f32 %v1244, %v507
  %v1261 = vadd.f32 %v1245, %v592
  %v1262 = vadd.f32 %v1246, %v593
  %v1263 = vadd.f32 %v1247, %v594
  %v1264 = vadd.f32 %v1248, %v595
  %v1265 = vadd.f32 %v1249, %v596
  %v1266 = vadd.f32 %v1250, %v597
  %v1267 = vadd.f32 %v1251, %v598
  %v1268 = vadd.f32 %v1252, %v599
  %v1269 = vmax.f32 %v1253, %v600
  %v1270 = vmax.f32 %v1254, %v601
  %v1271 = vmax.f32 %v1255, %v602
  %v1272 = vmax.f32 %v1256, %v603
  %v1273 = vmin.f32 %v1257, %v604
  %v1274 = vmin.f32 %v1258, %v605
  %v1275 = vmin.f32 %v1259, %v606
  %v1276 = vmin.f32 %v1260, %v607
  %s1277 = scalar_lea.vmem %s0, 768
  %v1278 = vld [vmem:[%s1277] sm:$0xff]
  %v1279 = vld [vmem:[%s1277 + $0x8] sm:$0xff]
  %v1280 = vld [vmem:[%s1277 + $0x10] sm:$0xff]
  %v1281 = vld [vmem:[%s1277 + $0x18] sm:$0x1]
  %v1282 = vsub.f32 %v1278, %v12
  %v1283 = vsub.f32 %v1279, %v12
  %v1284 = vsub.f32 %v1280, %v12
  %v1285 = vsub.f32 %v1281, %v12
  %v1286 = vmul.f32 %v1282, %v1282
  %v1287 = vmul.f32 %v1283, %v1283
  %v1288 = vmul.f32 %v1284, %v1284
  %v1289 = vmul.f32 %v1285, %v1285
  %v1290 = vadd.f32 %v1261, %v1282
  %v1291 = vadd.f32 %v1262, %v1283
  %v1292 = vadd.f32 %v1263, %v1284
  %v1293 = vadd.f32 %v1264, %v1285
  %v1294 = vadd.f32 %v1265, %v1286
  %v1295 = vadd.f32 %v1266, %v1287
  %v1296 = vadd.f32 %v1267, %v1288
  %v1297 = vadd.f32 %v1268, %v1289
  %v1298 = vmax.f32 %v1269, %v1282
  %v1299 = vmax.f32 %v1270, %v1283
  %v1300 = vmax.f32 %v1271, %v1284
  %v1301 = vmax.f32 %v1272, %v1285
  %v1302 = vmin.f32 %v1273, %v1282
  %v1303 = vmin.f32 %v1274, %v1283
  %v1304 = vmin.f32 %v1275, %v1284
  %v1305 = vmin.f32 %v1276, %v1285
  %v1306 = vsel %vm672, %v1290, 0.0
  %v1307 = vsel %vm672, %v1291, 0.0
  %v1308 = vadd.f32 %v1306, %v1307
  %v1309 = vsel %vm676, %v1292, 0.0
  %v1310 = vadd.f32 %v1308, %v1309
  %v1311 = vrot.slane %v1310, 4
  %v1312 = vadd.f32 %v1310, %v1311
  %v1313 = vrot.slane %v1312, 2
  %v1314 = vadd.f32 %v1312, %v1313
  %v1315 = vrot.slane %v1314, 1
  %v1316 = vadd.f32 %v1314, %v1315
  %v1317 = vsel %vm672, %v1294, 0.0
  %v1318 = vsel %vm672, %v1295, 0.0
  %v1319 = vadd.f32 %v1317, %v1318
  %v1320 = vsel %vm676, %v1296, 0.0
  %v1321 = vadd.f32 %v1319, %v1320
  %v1322 = vrot.slane %v1321, 4
  %v1323 = vadd.f32 %v1321, %v1322
  %v1324 = vrot.slane %v1323, 2
  %v1325 = vadd.f32 %v1323, %v1324
  %v1326 = vrot.slane %v1325, 1
  %v1327 = vadd.f32 %v1325, %v1326
  %v1328 = vsel %vm672, %v1298, -inf
  %v1329 = vsel %vm672, %v1299, -inf
  %v1330 = vsel %vm676, %v1300, -inf
  %v1331 = vmax.f32 %v1328, %v1329
  %v1332 = vmax.f32 %v1331, %v1330
  %v1333 = vrot.slane %v1332, 4
  %v1334 = vmax.f32 %v1332, %v1333
  %v1335 = vrot.slane %v1334, 2
  %v1336 = vmax.f32 %v1334, %v1335
  %v1337 = vrot.slane %v1336, 1
  %v1338 = vmax.f32 %v1336, %v1337
  %v1339 = vsel %vm672, %v1302, inf
  %v1340 = vsel %vm672, %v1303, inf
  %v1341 = vsel %vm676, %v1304, inf
  %v1342 = vmin.f32 %v1339, %v1340
  %v1343 = vmin.f32 %v1342, %v1341
  %v1344 = vrot.slane %v1343, 4
  %v1345 = vmin.f32 %v1343, %v1344
  %v1346 = vrot.slane %v1345, 2
  %v1347 = vmin.f32 %v1345, %v1346
  %v1348 = vrot.slane %v1347, 1
  %v1349 = vmin.f32 %v1347, %v1348
  %v1350 = vmul.f32 %v1316, 0.0034602077
  %v1351 = vmul.f32 %v1327, 0.0034602077
  %v1352 = vmul.f32 %v1350, %v1350
  %v1353 = vsub.f32 %v1351, %v1352
  %v1354 = vmax.f32 %v1353, 0.0
  %v1355 = vrsqrt.pop %v1354
  %v1356 = vmul.f32 %v1355, %v1354
  %v1357 = vmul.f32 %v1356, %v1355
  %v1358 = vmul.f32 0.5, %v1357
  %v1359 = vsub.f32 1.5, %v1358
  %v1360 = vmul.f32 %v1355, %v1359
  %vm1361 = vweird.f32 %v1354
  %vm1362 = vweird.f32 %v1355
  %vm1363 = vmor %vm1361, %vm1362
  %v1364 = vsel %vm1363, %v1355, %v1360
  %v1365 = vadd.f32 %v1350, %v8
  %v1366 = vrsqrt.pop %v1354
  %v1367 = vmul.f32 %v1366, %v1354
  %v1368 = vmul.f32 %v1367, %v1366
  %v1369 = vmul.f32 0.5, %v1368
  %v1370 = vsub.f32 1.5, %v1369
  %v1371 = vmul.f32 %v1366, %v1370
  %v1372 = vmul.f32 %v1354, %v1371
  %vm1373 = vcmp.eq.f32.partialorder %v1354, inf
  %v1374 = vsel %vm1373, %v1354, %v1372
  %vm1375 = vcmp.eq.f32.partialorder %v1354, 0.0
  %v1376 = vand.u32 %v1354, 2147483648
  %v1377 = vsel %vm1375, %v1376, %v1374
  %v1378 = vsub.f32 %v1338, %v1350
  %v1379 = vmul.f32 %v1378, %v1364
  %v1380 = vsub.f32 %v1350, %v1349
  %v1381 = vmul.f32 %v1380, %v1364
  %v1385 = vrot.slane %v1290, 4
  %v1386 = vrot.slane %v1291, 4
  %v1387 = vsel %vm753, %v1385, %v1386
  %v1388 = vrot.slane %v1292, 4
  %v1389 = vsel %vm753, %v1386, %v1388
  %v1393 = vsel %vm672, %v1387, 0.0
  %v1394 = vsel %vm672, %v1389, 0.0
  %v1395 = vadd.f32 %v1393, %v1394
  %v1396 = vsel %vm676, %v1388, 0.0
  %v1397 = vadd.f32 %v1395, %v1396
  %v1398 = vrot.slane %v1397, 4
  %v1399 = vadd.f32 %v1397, %v1398
  %v1400 = vrot.slane %v1399, 2
  %v1401 = vadd.f32 %v1399, %v1400
  %v1402 = vrot.slane %v1401, 1
  %v1403 = vadd.f32 %v1401, %v1402
  %v1407 = vrot.slane %v1294, 4
  %v1408 = vrot.slane %v1295, 4
  %v1409 = vsel %vm753, %v1407, %v1408
  %v1410 = vrot.slane %v1296, 4
  %v1411 = vsel %vm753, %v1408, %v1410
  %v1415 = vsel %vm672, %v1409, 0.0
  %v1416 = vsel %vm672, %v1411, 0.0
  %v1417 = vadd.f32 %v1415, %v1416
  %v1418 = vsel %vm676, %v1410, 0.0
  %v1419 = vadd.f32 %v1417, %v1418
  %v1420 = vrot.slane %v1419, 4
  %v1421 = vadd.f32 %v1419, %v1420
  %v1422 = vrot.slane %v1421, 2
  %v1423 = vadd.f32 %v1421, %v1422
  %v1424 = vrot.slane %v1423, 1
  %v1425 = vadd.f32 %v1423, %v1424
  %v1426 = vsel %vm795, %v1298, -inf
  %v1427 = vsel %vm797, %v1300, -inf
  %v1428 = vmax.f32 %v1426, %v1329
  %v1429 = vmax.f32 %v1428, %v1427
  %v1430 = vrot.slane %v1429, 4
  %v1431 = vmax.f32 %v1429, %v1430
  %v1432 = vrot.slane %v1431, 2
  %v1433 = vmax.f32 %v1431, %v1432
  %v1434 = vrot.slane %v1433, 1
  %v1435 = vmax.f32 %v1433, %v1434
  %v1436 = vsel %vm795, %v1302, inf
  %v1437 = vsel %vm797, %v1304, inf
  %v1438 = vmin.f32 %v1436, %v1340
  %v1439 = vmin.f32 %v1438, %v1437
  %v1440 = vrot.slane %v1439, 4
  %v1441 = vmin.f32 %v1439, %v1440
  %v1442 = vrot.slane %v1441, 2
  %v1443 = vmin.f32 %v1441, %v1442
  %v1444 = vrot.slane %v1443, 1
  %v1445 = vmin.f32 %v1443, %v1444
  %v1446 = vmul.f32 %v1403, 0.0034602077
  %v1447 = vmul.f32 %v1425, 0.0034602077
  %v1448 = vmul.f32 %v1446, %v1446
  %v1449 = vsub.f32 %v1447, %v1448
  %v1450 = vmax.f32 %v1449, 0.0
  %v1451 = vrsqrt.pop %v1450
  %v1452 = vmul.f32 %v1451, %v1450
  %v1453 = vmul.f32 %v1452, %v1451
  %v1454 = vmul.f32 0.5, %v1453
  %v1455 = vsub.f32 1.5, %v1454
  %v1456 = vmul.f32 %v1451, %v1455
  %vm1457 = vweird.f32 %v1450
  %vm1458 = vweird.f32 %v1451
  %vm1459 = vmor %vm1457, %vm1458
  %v1460 = vsel %vm1459, %v1451, %v1456
  %v1461 = vadd.f32 %v1446, %v8
  %v1462 = vrsqrt.pop %v1450
  %v1463 = vmul.f32 %v1462, %v1450
  %v1464 = vmul.f32 %v1463, %v1462
  %v1465 = vmul.f32 0.5, %v1464
  %v1466 = vsub.f32 1.5, %v1465
  %v1467 = vmul.f32 %v1462, %v1466
  %v1468 = vmul.f32 %v1450, %v1467
  %vm1469 = vcmp.eq.f32.partialorder %v1450, inf
  %v1470 = vsel %vm1469, %v1450, %v1468
  %vm1471 = vcmp.eq.f32.partialorder %v1450, 0.0
  %v1472 = vand.u32 %v1450, 2147483648
  %v1473 = vsel %vm1471, %v1472, %v1470
  %v1474 = vsub.f32 %v1435, %v1446
  %v1475 = vmul.f32 %v1474, %v1460
  %v1476 = vsub.f32 %v1446, %v1445
  %v1477 = vmul.f32 %v1476, %v1460
  %v1478 = vsel %vm672, %v1292, 0.0
  %v1479 = vadd.f32 %v1307, %v1478
  %v1480 = vsel %vm676, %v1293, 0.0
  %v1481 = vadd.f32 %v1479, %v1480
  %v1482 = vrot.slane %v1481, 4
  %v1483 = vadd.f32 %v1481, %v1482
  %v1484 = vrot.slane %v1483, 2
  %v1485 = vadd.f32 %v1483, %v1484
  %v1486 = vrot.slane %v1485, 1
  %v1487 = vadd.f32 %v1485, %v1486
  %v1488 = vsel %vm672, %v1296, 0.0
  %v1489 = vadd.f32 %v1318, %v1488
  %v1490 = vsel %vm676, %v1297, 0.0
  %v1491 = vadd.f32 %v1489, %v1490
  %v1492 = vrot.slane %v1491, 4
  %v1493 = vadd.f32 %v1491, %v1492
  %v1494 = vrot.slane %v1493, 2
  %v1495 = vadd.f32 %v1493, %v1494
  %v1496 = vrot.slane %v1495, 1
  %v1497 = vadd.f32 %v1495, %v1496
  %v1498 = vsel %vm672, %v1300, -inf
  %v1499 = vsel %vm676, %v1301, -inf
  %v1500 = vmax.f32 %v1329, %v1498
  %v1501 = vmax.f32 %v1500, %v1499
  %v1502 = vrot.slane %v1501, 4
  %v1503 = vmax.f32 %v1501, %v1502
  %v1504 = vrot.slane %v1503, 2
  %v1505 = vmax.f32 %v1503, %v1504
  %v1506 = vrot.slane %v1505, 1
  %v1507 = vmax.f32 %v1505, %v1506
  %v1508 = vsel %vm672, %v1304, inf
  %v1509 = vsel %vm676, %v1305, inf
  %v1510 = vmin.f32 %v1340, %v1508
  %v1511 = vmin.f32 %v1510, %v1509
  %v1512 = vrot.slane %v1511, 4
  %v1513 = vmin.f32 %v1511, %v1512
  %v1514 = vrot.slane %v1513, 2
  %v1515 = vmin.f32 %v1513, %v1514
  %v1516 = vrot.slane %v1515, 1
  %v1517 = vmin.f32 %v1515, %v1516
  %v1518 = vmul.f32 %v1487, 0.0034602077
  %v1519 = vmul.f32 %v1497, 0.0034602077
  %v1520 = vmul.f32 %v1518, %v1518
  %v1521 = vsub.f32 %v1519, %v1520
  %v1522 = vmax.f32 %v1521, 0.0
  %v1523 = vrsqrt.pop %v1522
  %v1524 = vmul.f32 %v1523, %v1522
  %v1525 = vmul.f32 %v1524, %v1523
  %v1526 = vmul.f32 0.5, %v1525
  %v1527 = vsub.f32 1.5, %v1526
  %v1528 = vmul.f32 %v1523, %v1527
  %vm1529 = vweird.f32 %v1522
  %vm1530 = vweird.f32 %v1523
  %vm1531 = vmor %vm1529, %vm1530
  %v1532 = vsel %vm1531, %v1523, %v1528
  %v1533 = vadd.f32 %v1518, %v8
  %v1534 = vrsqrt.pop %v1522
  %v1535 = vmul.f32 %v1534, %v1522
  %v1536 = vmul.f32 %v1535, %v1534
  %v1537 = vmul.f32 0.5, %v1536
  %v1538 = vsub.f32 1.5, %v1537
  %v1539 = vmul.f32 %v1534, %v1538
  %v1540 = vmul.f32 %v1522, %v1539
  %vm1541 = vcmp.eq.f32.partialorder %v1522, inf
  %v1542 = vsel %vm1541, %v1522, %v1540
  %vm1543 = vcmp.eq.f32.partialorder %v1522, 0.0
  %v1544 = vand.u32 %v1522, 2147483648
  %v1545 = vsel %vm1543, %v1544, %v1542
  %v1546 = vsub.f32 %v1507, %v1518
  %v1547 = vmul.f32 %v1546, %v1532
  %v1548 = vsub.f32 %v1518, %v1517
  %v1549 = vmul.f32 %v1548, %v1532
  %v1551 = vrot.slane %v832, 7
  %v1554 = vrot.slane %v904, 6
  %v1557 = vrot.slane %v1044, 5
  %v1560 = vrot.slane %v1140, 4
  %v1563 = vrot.slane %v1212, 3
  %v1566 = vrot.slane %v1365, 2
  %v1569 = vrot.slane %v1461, 1
  %vm1571 = vcmask 1040384
  %v1572 = vsel %vm1571, %v733, %v1551
  %vm1573 = vcmask 1041408
  %v1574 = vsel %vm1573, %v1572, %v1554
  %vm1575 = vcmask 1042432
  %v1576 = vsel %vm1575, %v1574, %v1557
  %v1577 = vsel %vm753, %v1576, %v1560
  %vm1578 = vcmask 1044480
  %v1579 = vsel %vm1578, %v1577, %v1563
  %vm1580 = vcmask 1045504
  %v1581 = vsel %vm1580, %v1579, %v1566
  %vm1582 = vcmask 1046528
  %v1583 = vsel %vm1582, %v1581, %v1569
  %1584 = vst.msk [vmem:[%s1] sm:$0xff] %vm672, %v1583
  %1585 = vst.msk [vmem:[%s1 + $0x8] sm:$0x1] %vm676, %v1533
  %v1586 = vsel %vm1571, %v745, %v844
  %v1587 = vsel %vm1573, %v1586, %v916
  %v1588 = vsel %vm1575, %v1587, %v1056
  %v1589 = vsel %vm753, %v1588, %v1152
  %v1590 = vsel %vm1578, %v1589, %v1224
  %v1591 = vsel %vm1580, %v1590, %v1377
  %v1592 = vsel %vm1582, %v1591, %v1473
  %s1593 = scalar_lea.vmem %s1, 16
  %1594 = vst.msk [vmem:[%s1593] sm:$0xff] %vm672, %v1592
  %1595 = vst.msk [vmem:[%s1593 + $0x8] sm:$0x1] %vm676, %v1545
  %v1596 = vsel %vm1571, %v747, %v846
  %v1597 = vsel %vm1573, %v1596, %v918
  %v1598 = vsel %vm1575, %v1597, %v1058
  %v1599 = vsel %vm753, %v1598, %v1154
  %v1600 = vsel %vm1578, %v1599, %v1226
  %v1601 = vsel %vm1580, %v1600, %v1379
  %v1602 = vsel %vm1582, %v1601, %v1475
  %s1603 = scalar_lea.vmem %s1, 32
  %1604 = vst.msk [vmem:[%s1603] sm:$0xff] %vm672, %v1602
  %1605 = vst.msk [vmem:[%s1603 + $0x8] sm:$0x1] %vm676, %v1547
  %v1606 = vsel %vm1571, %v749, %v848
  %v1607 = vsel %vm1573, %v1606, %v920
  %v1608 = vsel %vm1575, %v1607, %v1060
  %v1609 = vsel %vm753, %v1608, %v1156
  %v1610 = vsel %vm1578, %v1609, %v1228
  %v1611 = vsel %vm1580, %v1610, %v1381
  %v1612 = vsel %vm1582, %v1611, %v1477
  %s1613 = scalar_lea.vmem %s1, 48
  %1614 = vst.msk [vmem:[%s1613] sm:$0xff] %vm672, %v1612
  %1615 = vst.msk [vmem:[%s1613 + $0x8] sm:$0x1] %vm676, %v1549
  // Predicated region
  $region6: #{tpu_custom_call.1} parent=0 // pred_check
    _
  $region7: #{tpu_custom_call.1} parent=0 // pred_check_branch
    %1617 = sbr.rel (0) target = $region9
  $region8: #{tpu_custom_call.1} parent=0 // pred_region
    _
  $region9: #{tpu_custom_call.1} parent=0 // pred_fallthru
    _
  // Predicated region
  $region10: #{tpu_custom_call.1} parent=0 // pred_check
    _
  $region11: #{tpu_custom_call.1} parent=0 // pred_check_branch
    %1619 = sbr.rel (0) target = $region13
  $region12: #{tpu_custom_call.1} parent=0 // pred_region
    _
  $region13: #{tpu_custom_call.1} parent=0 // pred_fallthru
    _

</llo_original>
